<compile_context>
chip_gen: v7x
topology: tpu7x:2x2x1
jax: 0.10.0
libtpu: 0.0.40
codegen_flags: <defaults>
</compile_context>

<pallas_src>
import functools

import numpy as np
import jax
import jax.numpy as jnp
from jax.experimental import pallas as pl
from jax.experimental.pallas import tpu as pltpu


# ----------------------------------------------------------------------------- utils
def _round_up(x, m):
    return (x + m - 1) // m * m


def _cdiv(a, b):
    return (a + b - 1) // b


def _pad2(a, rows, cols):
    r, c = a.shape
    if r == rows and c == cols:
        return a
    return jnp.pad(a, ((0, rows - r), (0, cols - c)))


@functools.lru_cache(maxsize=None)
def _num_tensorcores():
    """2 on v7x-class parts (two TensorCores per chip), else 1."""
    try:
        kind = jax.devices()[0].device_kind.lower()
    except Exception:
        return 1
    return 2 if ("v7" in kind or "7x" in kind) else 1


@functools.lru_cache(maxsize=None)
def _vmem_budget():
    """(vmem_limit_bytes to request, double-buffered tile byte budget)."""
    cap = None
    try:
        cap = getattr(pltpu.get_tpu_info(), "vmem_capacity_bytes", None)
    except Exception:
        cap = None
    if not cap:
        cap = 64 << 20          # conservative: v7x physical per-TC VMEM
    limit = min(int(cap) * 3 // 4, 96 << 20)
    budget = limit // 2         # headroom for Mosaic internal scratch
    return limit, budget


# ------------------------------------------------------------------- fused matmul kernels
def _mm_epilogue(acc, sb_ref, r_ref, relu, out_dtype):
    # acc: (tm, tn) f32; sb_ref: (2, tn) f32 -> row 0 = scale, row 1 = shift.
    y = acc * sb_ref[0:1, :] + sb_ref[1:2, :]
    if r_ref is not None:
        y = y + r_ref[...].astype(jnp.float32)
    if relu:
        y = jnp.maximum(y, 0.0)
    return y.astype(out_dtype)


def _mm_kernel_1k(*refs, relu, has_residual):
    """2-D grid (i, j): full-K contraction, one dot per output tile, no scratch."""
    if has_residual:
        x_ref, w_ref, sb_ref, r_ref, o_ref = refs
    else:
        x_ref, w_ref, sb_ref, o_ref = refs
        r_ref = None
    acc = jnp.dot(x_ref[...], w_ref[...], preferred_element_type=jnp.float32)
    o_ref[...] = _mm_epilogue(acc, sb_ref, r_ref, relu, o_ref.dtype)


def _mm_kernel_multik(*refs, relu, has_residual):
    """3-D grid (i, j, k) fallback for Ks too large to keep resident in VMEM."""
    if has_residual:
        x_ref, w_ref, sb_ref, r_ref, o_ref, acc_ref = refs
    else:
        x_ref, w_ref, sb_ref, o_ref, acc_ref = refs
        r_ref = None

    @pl.when(pl.program_id(2) == 0)
    def _zero():
        acc_ref[...] = jnp.zeros_like(acc_ref)

    acc_ref[...] += jnp.dot(x_ref[...], w_ref[...],
                            preferred_element_type=jnp.float32)

    @pl.when(pl.program_id(2) == pl.num_programs(2) - 1)
    def _finish():
        o_ref[...] = _mm_epilogue(acc_ref[...], sb_ref, r_ref, relu, o_ref.dtype)


def _pick_tiles(M, K, N, xb, wb, ob, has_res, budget, n_tc):
    """Shape-adaptive tiles; K padded only to the lane boundary and kept whole."""
    Kp = K if K < 128 else _round_up(K, 128)
    tm = min(512, _round_up(M, 16))
    tn = min(512, _round_up(N, 128))
    Mp = _round_up(M, tm)
    Np = _round_up(N, tn)
    # Only on multi-TensorCore parts (v7x): ensure >=2 parallel blocks when the
    # grid would otherwise collapse to a single block.
    if n_tc > 1 and Mp == tm and Np == tn and tn >= 256:
        tn //= 2
        Np = _round_up(N, tn)

    def footprint(tm_, tk_, tn_):
        f = 2 * (tm_ * tk_ * xb) + 2 * (tk_ * tn_ * wb) + 2 * (tm_ * tn_ * ob)
        f += 2 * (2 * tn_ * 4)                       # packed scale/shift
        if has_res:
            f += 2 * (tm_ * tn_ * xb)
        return f

    tk = Kp
    while footprint(tm, tk, tn) > budget and tm > 128:
        tm = max(128, _round_up(tm // 2, 16))
        Mp = _round_up(M, tm)
    while footprint(tm, tk, tn) > budget and tn > 128:
        tn = max(128, (tn // 2) // 128 * 128)
        Np = _round_up(N, tn)
    while footprint(tm, tk, tn) > budget and tk > 512:
        tk = _round_up(_cdiv(tk, 2), 128)
    if tk != Kp:                                     # split-K fallback: Kp % tk == 0
        Kp = tk * _cdiv(Kp, tk)
    return tm, tk, tn, Mp, Kp, Np


def _fused_matmul(x, w, scale, shift, residual, relu, out_dtype):
    """out = relu?((x @ w) * scale + shift [+ residual]); f32 accumulate/epilogue."""
    M, K = x.shape
    K2, N = w.shape
    assert K == K2
    has_residual = residual is not None
    xb = x.dtype.itemsize
    wb = w.dtype.itemsize
    ob = jnp.dtype(out_dtype).itemsize
    vmem_limit, budget = _vmem_budget()
    tm, tk, tn, Mp, Kp, Np = _pick_tiles(M, K, N, xb, wb, ob, has_residual,
                                         budget, _num_tensorcores())

    xp = _pad2(x, Mp, Kp)
    wp = _pad2(w, Kp, Np)
    sb = _pad2(jnp.stack([scale.astype(jnp.float32),
                          shift.astype(jnp.float32)], axis=0), 2, Np)

    nk = Kp // tk
    cost = pl.CostEstimate(
        flops=2 * M * K * N,
        transcendentals=0,
        bytes_accessed=(M * K * xb + K * N * wb + M * N * ob
                        + (M * N * xb if has_residual else 0) + 2 * N * 4))
    cparams = pltpu.CompilerParams(
        dimension_semantics=(("parallel", "parallel") if nk == 1
                             else ("parallel", "parallel", "arbitrary")),
        vmem_limit_bytes=vmem_limit)

    if nk == 1:
        in_arrays = [xp, wp, sb]
        in_specs = [
            pl.BlockSpec((tm, tk), lambda i, j: (i, 0)),
            pl.BlockSpec((tk, tn), lambda i, j: (0, j)),
            pl.BlockSpec((2, tn), lambda i, j: (0, j)),
        ]
        if has_residual:
            in_arrays.append(_pad2(residual, Mp, Np))
            in_specs.append(pl.BlockSpec((tm, tn), lambda i, j: (i, j)))
        out = pl.pallas_call(
            functools.partial(_mm_kernel_1k, relu=relu, has_residual=has_residual),
            out_shape=jax.ShapeDtypeStruct((Mp, Np), out_dtype),
            grid_spec=pltpu.PrefetchScalarGridSpec(
                num_scalar_prefetch=0,
                grid=(Mp // tm, Np // tn),
                in_specs=in_specs,
                out_specs=pl.BlockSpec((tm, tn), lambda i, j: (i, j)),
            ),
            compiler_params=cparams,
            cost_estimate=cost,
        )(*in_arrays)
    else:
        in_arrays = [xp, wp, sb]
        in_specs = [
            pl.BlockSpec((tm, tk), lambda i, j, k: (i, k)),
            pl.BlockSpec((tk, tn), lambda i, j, k: (k, j)),
            pl.BlockSpec((2, tn), lambda i, j, k: (0, j)),
        ]
        if has_residual:
            in_arrays.append(_pad2(residual, Mp, Np))
            in_specs.append(pl.BlockSpec((tm, tn), lambda i, j, k: (i, j)))
        out = pl.pallas_call(
            functools.partial(_mm_kernel_multik, relu=relu,
                              has_residual=has_residual),
            out_shape=jax.ShapeDtypeStruct((Mp, Np), out_dtype),
            grid_spec=pltpu.PrefetchScalarGridSpec(
                num_scalar_prefetch=0,
                grid=(Mp // tm, Np // tn, Kp // tk),
                in_specs=in_specs,
                out_specs=pl.BlockSpec((tm, tn), lambda i, j, k: (i, j)),
                scratch_shapes=[pltpu.VMEM((tm, tn), jnp.float32)],
            ),
            compiler_params=cparams,
            cost_estimate=cost,
        )(*in_arrays)

    if Mp != M or Np != N:
        out = out[:M, :N]
    return out


# ------------------------------------------------------------------- conv + BN wrapper
def _im2col(x_nhwc, kh, kw, stride, pad):
    N, H, W, C = x_nhwc.shape
    Ho = (H + 2 * pad - kh) // stride + 1
    Wo = (W + 2 * pad - kw) // stride + 1
    if pad:
        x_nhwc = jnp.pad(x_nhwc, ((0, 0), (pad, pad), (pad, pad), (0, 0)))
    if kh == 1 and kw == 1:
        xs = x_nhwc[:, 0:stride * Ho:stride, 0:stride * Wo:stride, :]
        return xs.reshape(N * Ho * Wo, C), Ho, Wo
    cols = []
    for i in range(kh):
        for j in range(kw):
            cols.append(x_nhwc[:, i:i + stride * Ho:stride, j:j + stride * Wo:stride, :])
    patches = jnp.stack(cols, axis=3)                 # (N, Ho, Wo, kh*kw, C)
    return patches.reshape(N * Ho * Wo, kh * kw * C), Ho, Wo


@functools.partial(jax.jit, static_argnames=("stride", "pad", "relu", "out_dtype"))
def _conv_bn_impl(x_nhwc, w_hwio, scale, shift, residual, *,
                  stride, pad, relu, out_dtype):
    N, H, W, Cin = x_nhwc.shape
    kh, kw, _, Cout = w_hwio.shape
    patches, Ho, Wo = _im2col(x_nhwc, kh, kw, stride, pad)
    wmat = w_hwio.reshape(kh * kw * Cin, Cout)
    res = residual.reshape(N * Ho * Wo, Cout) if residual is not None else None
    y = _fused_matmul(patches, wmat, scale, shift, res, relu, out_dtype)
    return y.reshape(N, Ho, Wo, Cout)


def conv_bn(x_nhwc, w_hwio, bn, stride, pad, relu, residual=None,
            out_dtype=jnp.bfloat16):
    """Conv2d (no bias) + BN(scale,shift) + optional residual + optional ReLU."""
    return _conv_bn_impl(x_nhwc, w_hwio, bn[0], bn[1], residual,
                         stride=stride, pad=pad, relu=relu, out_dtype=out_dtype)


# ------------------------------------------------------------------- maxpool 3x3 / s2
def _maxpool_kernel(p_ref, o_ref):
    acc = p_ref[0]
    for t in range(1, 9):
        acc = jnp.maximum(acc, p_ref[t])
    o_ref[...] = acc


@jax.jit
def maxpool_3x3_s2(x_nhwc):
    N, H, W, C = x_nhwc.shape
    k, s, pad = 3, 2, 1
    Ho = (H + 2 * pad - k) // s + 1
    Wo = (W + 2 * pad - k) // s + 1
    xp = jnp.pad(x_nhwc, ((0, 0), (pad, pad), (pad, pad), (0, 0)),
                 constant_values=-jnp.inf)
    cols = [xp[:, i:i + s * Ho:s, j:j + s * Wo:s, :]
            for i in range(k) for j in range(k)]
    # Lane-dense layout: rows = N*Ho, lanes = Wo*C (>= 128, unmasked stores).
    R, L = N * Ho, Wo * C
    patches = jnp.stack(cols, axis=0).reshape(9, R, L)

    tm = min(512, _round_up(R, 16))
    tl = min(2048, _round_up(L, 128))
    Rp = _round_up(R, tm)
    Lp = _round_up(L, tl)
    if Rp != R or Lp != L:
        patches = jnp.pad(patches, ((0, 0), (0, Rp - R), (0, Lp - L)),
                          constant_values=-jnp.inf)
    out = pl.pallas_call(
        _maxpool_kernel,
        out_shape=jax.ShapeDtypeStruct((Rp, Lp), x_nhwc.dtype),
        grid_spec=pltpu.PrefetchScalarGridSpec(
            num_scalar_prefetch=0,
            grid=(Rp // tm, Lp // tl),
            in_specs=[pl.BlockSpec((9, tm, tl), lambda i, j: (0, i, j))],
            out_specs=pl.BlockSpec((tm, tl), lambda i, j: (i, j)),
        ),
        compiler_params=pltpu.CompilerParams(
            dimension_semantics=("parallel", "parallel")),
    )(patches)
    if Rp != R or Lp != L:
        out = out[:R, :L]
    return out.reshape(N, Ho, Wo, C)


# ------------------------------------------------------------------- bilinear upsample
def _interp_matrix_np(out_size, in_size):
    """align_corners=True bilinear interpolation matrix (out_size, in_size), numpy."""
    if in_size == 1:
        return np.ones((out_size, 1), np.float32)
    if out_size == 1:
        m = np.zeros((1, in_size), np.float32)
        m[0, 0] = 1.0
        return m
    src = np.arange(out_size, dtype=np.float64) * (in_size - 1) / (out_size - 1)
    lo = np.clip(np.floor(src).astype(np.int64), 0, in_size - 2)
    frac = src - lo
    m = np.zeros((out_size, in_size), np.float32)
    m[np.arange(out_size), lo] += (1.0 - frac)
    m[np.arange(out_size), lo + 1] += frac
    return m


@functools.partial(jax.jit, static_argnames=("Hout", "Wout"))
def bilinear_upsample(x_nhwc, *, Hout, Wout):
    """F.upsample_bilinear (align_corners=True) of NHWC features; returns NCHW f32.

    One Pallas matmul against the Kronecker product of the two separable
    interpolation matrices: (N*C, h*w) @ (h*w, Hout*Wout) -> NCHW directly.
    The tiny K = h*w contraction is kept un-padded (full-dim block).
    """
    N, h, w, C = x_nhwc.shape
    A = _interp_matrix_np(Hout, h)                     # (Hout, h)
    B = _interp_matrix_np(Wout, w)                     # (Wout, w)
    Wm = jnp.asarray(
        np.einsum("Yi,Xj->ijYX", A, B).reshape(h * w, Hout * Wout))
    xt = jnp.transpose(x_nhwc.astype(jnp.float32), (0, 3, 1, 2)).reshape(N * C, h * w)
    ones = jnp.ones((Hout * Wout,), jnp.float32)
    zeros = jnp.zeros((Hout * Wout,), jnp.float32)
    y = _fused_matmul(xt, Wm, ones, zeros, None, False, jnp.float32)
    return y.reshape(N, C, Hout, Wout)


# ------------------------------------------------------------------- parameters
class ParamGen:
    def __init__(self, seed=0):
        self.key = jax.random.PRNGKey(seed)
        self.count = 0

    def _next(self):
        self.count += 1
        return jax.random.fold_in(self.key, self.count)

    def conv(self, kh, kw, cin, cout, std=None):
        if std is None:
            std = (2.0 / (kh * kw * cin)) ** 0.5          # He init
        w = std * jax.random.normal(self._next(), (kh, kw, cin, cout), jnp.float32)
        return w.astype(jnp.bfloat16)                     # weights stored bf16

    def bn(self, c, eps=1e-5):
        gamma = 1.0 + 0.1 * jax.random.normal(self._next(), (c,), jnp.float32)
        beta = 0.1 * jax.random.normal(self._next(), (c,), jnp.float32)
        mean = 0.1 * jax.random.normal(self._next(), (c,), jnp.float32)
        var = 1.0 + 0.1 * jnp.abs(jax.random.normal(self._next(), (c,), jnp.float32))
        scale = gamma / jnp.sqrt(var + eps)
        shift = beta - mean * scale
        return (scale, shift)                             # kept f32


def make_resnet50_params(num_classes=16, seed=0):
    pg = ParamGen(seed)
    params = {}
    params["conv1_w"] = pg.conv(7, 7, 3, 64)
    params["bn1"] = pg.bn(64)

    expansion = 4
    inplanes = 64
    cfg = [(64, 3, 1), (128, 4, 2), (256, 6, 2), (512, 3, 2)]   # ResNet-50
    for li, (planes, nblocks, stride) in enumerate(cfg):
        blocks = []
        for b in range(nblocks):
            s = stride if b == 0 else 1
            blk = {
                "stride": s,
                "conv1_w": pg.conv(1, 1, inplanes, planes), "bn1": pg.bn(planes),
                "conv2_w": pg.conv(3, 3, planes, planes),   "bn2": pg.bn(planes),
                "conv3_w": pg.conv(1, 1, planes, planes * expansion),
                "bn3": pg.bn(planes * expansion),
            }
            if b == 0 and (s != 1 or inplanes != planes * expansion):
                blk["down_w"] = pg.conv(1, 1, inplanes, planes * expansion)
                blk["down_bn"] = pg.bn(planes * expansion)
            blocks.append(blk)
            inplanes = planes * expansion
        params[f"layer{li + 1}"] = blocks

    # fc replaced by Conv2d(2048, num_classes, 1); weight ~ N(0, 0.01), bias zero
    params["fc_w"] = pg.conv(1, 1, inplanes, num_classes, std=0.01)
    params["fc_b"] = jnp.zeros((num_classes,), jnp.float32)
    return params


# ------------------------------------------------------------------- model forward
def bottleneck(x, p):
    identity = x
    out = conv_bn(x, p["conv1_w"], p["bn1"], stride=1, pad=0, relu=True)
    out = conv_bn(out, p["conv2_w"], p["bn2"], stride=p["stride"], pad=1, relu=True)
    if "down_w" in p:
        identity = conv_bn(x, p["down_w"], p["down_bn"],
                           stride=p["stride"], pad=0, relu=False)
    # conv3 + bn3, residual add, ReLU — all fused in the matmul epilogue
    out = conv_bn(out, p["conv3_w"], p["bn3"], stride=1, pad=0,
                  relu=True, residual=identity)
    return out


def resnet50_32s_forward(x_nchw, params):
    """Input NCHW (like PyTorch); output NCHW (N, num_classes, H, W), float32."""
    N, C, H, W = x_nchw.shape
    x = jnp.transpose(x_nchw, (0, 2, 3, 1)).astype(jnp.bfloat16)   # -> NHWC bf16

    # stem
    x = conv_bn(x, params["conv1_w"], params["bn1"], stride=2, pad=3, relu=True)
    x = maxpool_3x3_s2(x)

    # residual stages (output stride 32)
    for lname in ("layer1", "layer2", "layer3", "layer4"):
        for blk in params[lname]:
            x = bottleneck(x, blk)

    # fc as 1x1 conv (scale=1, bias=fc_b, no ReLU), f32 output for the interpolation
    nc = params["fc_w"].shape[-1]
    x = conv_bn(x, params["fc_w"], (jnp.ones((nc,), jnp.float32), params["fc_b"]),
                stride=1, pad=0, relu=False, out_dtype=jnp.float32)

    # bilinear upsample (align_corners=True) back to input spatial size, NCHW out
    return bilinear_upsample(x, Hout=H, Wout=W)


# ------------------------------------------------------------------- main
if __name__ == "__main__":
    num_classes = 16
    key = jax.random.PRNGKey(0)
    x = jax.random.normal(key, (2, 3, 64, 64), jnp.float32)   # NCHW, stride-32 safe size

    params = make_resnet50_params(num_classes=num_classes, seed=0)
    out = resnet50_32s_forward(x, params)
    out = jax.block_until_ready(out)

    assert out.shape == (2, num_classes, 64, 64), out.shape
    assert bool(jnp.all(jnp.isfinite(out)))
    print("KERNEL_OK")
</pallas_src>

<mosaic_0001>
module attributes {stable_mosaic.version = 11 : i64} {
  func.func @_mm_kernel_1k(%arg0: i32, %arg1: i32, %arg2: memref<512x256xbf16, #tpu.memory_space<vmem>>, %arg3: memref<256x128xbf16, #tpu.memory_space<vmem>>, %arg4: memref<2x128xf32, #tpu.memory_space<vmem>>, %arg5: memref<512x128xbf16, #tpu.memory_space<vmem>>) attributes {dimension_semantics = [#tpu.dimension_semantics<parallel>, #tpu.dimension_semantics<parallel>], iteration_bounds = array<i64: 4, 1>, scalar_prefetch = 0 : i64, scratch_operands = 0 : i64, tpu.core_type = #tpu.core_type<tc>, window_params = [{transform_indices = @transform_0, window_bounds = array<i64: 512, 256>}, {transform_indices = @transform_1, window_bounds = array<i64: 256, 128>}, {transform_indices = @transform_2, window_bounds = array<i64: 2, 128>}, {transform_indices = @transform_3, window_bounds = array<i64: 512, 128>}]} {
    %c0 = arith.constant 0 : index
    %c0_0 = arith.constant 0 : index
    %0 = vector.load %arg2[%c0, %c0_0] : memref<512x256xbf16, #tpu.memory_space<vmem>>, vector<512x256xbf16>
    %c0_1 = arith.constant 0 : index
    %c0_2 = arith.constant 0 : index
    %1 = vector.load %arg3[%c0_1, %c0_2] : memref<256x128xbf16, #tpu.memory_space<vmem>>, vector<256x128xbf16>
    %cst = arith.constant dense<0.000000e+00> : vector<512x128xf32>
    %2 = tpu.matmul %0, %1, %cst {dimension_numbers = #tpu.dot_dimension_numbers<[1], [0], [0], [1], [0, 0, 1, 1], [], []>} : vector<512x256xbf16>, vector<256x128xbf16>, vector<512x128xf32> -> vector<512x128xf32>
    %c0_3 = arith.constant 0 : index
    %c0_4 = arith.constant 0 : index
    %3 = vector.load %arg4[%c0_3, %c0_4] : memref<2x128xf32, #tpu.memory_space<vmem>>, vector<1x128xf32>
    %4 = vector.broadcast %3 : vector<1x128xf32> to vector<512x128xf32>
    %5 = arith.mulf %2, %4 : vector<512x128xf32>
    %c1 = arith.constant 1 : index
    %c0_5 = arith.constant 0 : index
    %6 = vector.load %arg4[%c1, %c0_5] : memref<2x128xf32, #tpu.memory_space<vmem>>, vector<1x128xf32>
    %7 = vector.broadcast %6 : vector<1x128xf32> to vector<512x128xf32>
    %8 = arith.addf %5, %7 : vector<512x128xf32>
    %cst_6 = arith.constant 0.000000e+00 : f32
    %9 = vector.broadcast %cst_6 : f32 to vector<512x128xf32>
    %10 = arith.maximumf %8, %9 : vector<512x128xf32>
    %11 = arith.truncf %10 : vector<512x128xf32> to vector<512x128xbf16>
    %c0_7 = arith.constant 0 : index
    %c0_8 = arith.constant 0 : index
    %12 = vector.load %arg5[%c0_7, %c0_8] : memref<512x128xbf16, #tpu.memory_space<vmem>>, vector<512x128xbf16>
    tpu.vector_store %arg5[%c0_7, %c0_8], %11 {strides = array<i32>} : memref<512x128xbf16, #tpu.memory_space<vmem>>, vector<512x128xbf16>,
    return
  }
  func.func @transform_0(%arg0: i32, %arg1: i32) -> (i32, i32) {
    %c0_i32 = arith.constant 0 : i32
    %c0_i32_0 = arith.constant 0 : i32
    return %arg0, %c0_i32 : i32, i32
  }
  func.func @transform_1(%arg0: i32, %arg1: i32) -> (i32, i32) {
    %c0_i32 = arith.constant 0 : i32
    %c0_i32_0 = arith.constant 0 : i32
    return %c0_i32, %arg1 : i32, i32
  }
  func.func @transform_2(%arg0: i32, %arg1: i32) -> (i32, i32) {
    %c0_i32 = arith.constant 0 : i32
    %c0_i32_0 = arith.constant 0 : i32
    return %c0_i32, %arg1 : i32, i32
  }
  func.func @transform_3(%arg0: i32, %arg1: i32) -> (i32, i32) {
    %c0_i32 = arith.constant 0 : i32
    return %arg0, %arg1 : i32, i32
  }
}

</mosaic_0001>

<llo_original>
// kernel: _conv_bn_impl.1
$region0: #{_conv_bn_impl.1}
  #allocation0 [shape = 'u32[]', space=smem, size = 0x4, offset = 0x4, fixed_abs, tag = 'smem constant byte address 0x4 - core index']
  #allocation1 [shape = 'u32[144,128]{1,0:T(1,128)}', space=vmem, size = 0x12000, scoped, tag = 'internal scratch']
  %s0 = inlined_call_operand.vmem [shape: bf16[2048,256], index: 0, kind: input, shape index: {}]
  %s1 = inlined_call_operand.vmem [shape: bf16[256,128], index: 1, kind: input, shape index: {}]
  %s2 = inlined_call_operand.vmem [shape: f32[2,128], index: 2, kind: input, shape index: {}]
  %s3 = inlined_call_operand.hbm [shape: bf16[2048,128], index: 3, kind: output, shape index: {}]
  %s4 = sld [smem:[#allocation0]]
  $region45: #{_conv_bn_impl.1} parent=0
    _
  %s6 = ssub.s32 1, %s4
  %s7 = scalar_select 0, %s6, %s4
  $region1: #{_conv_bn_impl.1} parent=0
    #allocation2 [shape = 'u8[262144]{0}', space=vmem, size = 0x40000, scoped, tag = 'output window, operand 0']
    #allocation3 [shape = 's32[2]{0}', space=sflag, size = 0x8, scoped, tag = 'scoped memory for _conv_bn_impl.1']
    %8 = vsyncpa [#allocation3], 0
    %s9 = scalar_lea.sflag [#allocation3], 1
    %10 = vsyncpa %s9, 0
    loop: start=0, step=1, limit=6
    $region2: #{_conv_bn_impl.1} parent=1 // loop_pre_header
      _
    $region3: #{_conv_bn_impl.1} parent=1 // loop_header
      %s12 = sphi 0, %s16
      %p13 = scmp.ge.s32.totalorder %s12, 6
      %s19 = sphi 0, %s31
      %s20 = sphi 0, %s27
      %s21 = sphi 0, %s19
      %s22 = sphi 0, %s20
      %s23 = sphi 0, %s21
      %s24 = sphi 0, %s22
      %s34 = sphi 0, %s36
      %s37 = sphi 0, %s34
      %s38 = sphi 0, %s37
      %s54 = sphi 0, %s38
      %s60 = sphi 0, %s62
      %s63 = sphi 0, %s60
      %s64 = sphi 0, %s63
      %s80 = sphi 0, %s64
      %s86 = sphi 0, %s88
      %s89 = sphi 0, %s86
      %s90 = sphi 0, %s89
      %s106 = sphi 0, %s90
      %s114 = sphi 0, %s116
      %s117 = sphi 0, %s114
      %s118 = sphi 0, %s117
      %s134 = sphi 0, %s118
    $region4: #{_conv_bn_impl.1} parent=1 // loop_header_branch
      %15 = sbr.rel (%p13) target = $region8
    $region5: #{_conv_bn_impl.1} parent=1 // loop_body
      %s17 = ssub.s32 %s12, 1
      %s18 = ssub.s32 %s12, 2
      %s25 = sadd.s32 1, %s20
      %p26 = scmp.ge.s32.totalorder %s25, 1
      %s27 = scalar_select %p26, 0, %s25
      %s28 = sadd.s32 1, %s19
      %s29 = scalar_select %p26, %s28, %s19
      %p30 = scmp.ge.s32.totalorder %s29, 4
      %s31 = scalar_select %p30, 0, %s29
      %s32 = ssub.s32 %s19, %s31
      %p33 = scmp.eq.s32.totalorder %s32, 0
      %s35 = sadd.s32 %s34, 1
      %s36 = scalar_select %p33, %s34, %s35
      %p39 = pneg %p33
      %p40 = scmp.eq.s32.totalorder %s12, 3
      %p41 = por %p39, %p40
      %p42 = scmp.ne.s32.totalorder %s34, %s37
      %p43 = scmp.eq.s32.totalorder %s12, 0
      %p44 = por %p42, %p43
      %p45 = scmp.ne.s32.totalorder %s34, %s37
      %p46 = scmp.eq.s32.totalorder %s17, 3
      %p47 = por %p45, %p46
      %p48 = scmp.ne.s32.totalorder %s37, %s38
      %p49 = scmp.eq.s32.totalorder %s17, 0
      %p50 = por %p48, %p49
      %p51 = scmp.ne.s32.totalorder %s37, %s38
      %p52 = scmp.eq.s32.totalorder %s18, 3
      %p53 = por %p51, %p52
      %p55 = scmp.ne.s32.totalorder %s38, %s54
      %p56 = scmp.eq.s32.totalorder %s18, 0
      %p57 = por %p55, %p56
      %s58 = ssub.s32 %s20, %s27
      %p59 = scmp.eq.s32.totalorder %s58, 0
      %s61 = sadd.s32 %s60, 1
      %s62 = scalar_select %p59, %s60, %s61
      %p65 = pneg %p59
      %p66 = scmp.eq.s32.totalorder %s12, 3
      %p67 = por %p65, %p66
      %p68 = scmp.ne.s32.totalorder %s60, %s63
      %p69 = scmp.eq.s32.totalorder %s12, 0
      %p70 = por %p68, %p69
      %p71 = scmp.ne.s32.totalorder %s60, %s63
      %p72 = scmp.eq.s32.totalorder %s17, 3
      %p73 = por %p71, %p72
      %p74 = scmp.ne.s32.totalorder %s63, %s64
      %p75 = scmp.eq.s32.totalorder %s17, 0
      %p76 = por %p74, %p75
      %p77 = scmp.ne.s32.totalorder %s63, %s64
      %p78 = scmp.eq.s32.totalorder %s18, 3
      %p79 = por %p77, %p78
      %p81 = scmp.ne.s32.totalorder %s64, %s80
      %p82 = scmp.eq.s32.totalorder %s18, 0
      %p83 = por %p81, %p82
      %s84 = ssub.s32 %s20, %s27
      %p85 = scmp.eq.s32.totalorder %s84, 0
      %s87 = sadd.s32 %s86, 1
      %s88 = scalar_select %p85, %s86, %s87
      %p91 = pneg %p85
      %p92 = scmp.eq.s32.totalorder %s12, 3
      %p93 = por %p91, %p92
      %p94 = scmp.ne.s32.totalorder %s86, %s89
      %p95 = scmp.eq.s32.totalorder %s12, 0
      %p96 = por %p94, %p95
      %p97 = scmp.ne.s32.totalorder %s86, %s89
      %p98 = scmp.eq.s32.totalorder %s17, 3
      %p99 = por %p97, %p98
      %p100 = scmp.ne.s32.totalorder %s89, %s90
      %p101 = scmp.eq.s32.totalorder %s17, 0
      %p102 = por %p100, %p101
      %p103 = scmp.ne.s32.totalorder %s89, %s90
      %p104 = scmp.eq.s32.totalorder %s18, 3
      %p105 = por %p103, %p104
      %p107 = scmp.ne.s32.totalorder %s90, %s106
      %p108 = scmp.eq.s32.totalorder %s18, 0
      %p109 = por %p107, %p108
      %s110 = ssub.s32 %s19, %s31
      %s111 = ssub.s32 %s20, %s27
      %s112 = sor.u32 %s110, %s111
      %p113 = scmp.eq.s32.totalorder %s112, 0
      %s115 = sadd.s32 %s114, 1
      %s116 = scalar_select %p113, %s114, %s115
      %p119 = pneg %p113
      %p120 = scmp.eq.s32.totalorder %s12, 3
      %p121 = por %p119, %p120
      %p122 = scmp.ne.s32.totalorder %s114, %s117
      %p123 = scmp.eq.s32.totalorder %s12, 0
      %p124 = por %p122, %p123
      %p125 = scmp.ne.s32.totalorder %s114, %s117
      %p126 = scmp.eq.s32.totalorder %s17, 3
      %p127 = por %p125, %p126
      %p128 = scmp.ne.s32.totalorder %s117, %s118
      %p129 = scmp.eq.s32.totalorder %s17, 0
      %p130 = por %p128, %p129
      %p131 = scmp.ne.s32.totalorder %s117, %s118
      %p132 = scmp.eq.s32.totalorder %s18, 3
      %p133 = por %p131, %p132
      %p135 = scmp.ne.s32.totalorder %s118, %s134
      %p136 = scmp.eq.s32.totalorder %s18, 0
      %p137 = por %p135, %p136
      %p138 = scmp.le.s32.totalorder 1, %s12
      %p139 = scmp.lt.s32.totalorder %s12, 5
      %p140 = pnand %p138, %p139
      %p141 = pneg %p140
      // Predicated region
      $region9: #{_conv_bn_impl.1} parent=5 // pred_check
        _
      $region10: #{_conv_bn_impl.1} parent=5 // pred_check_branch
        %143 = sbr.rel (%p140) target = $region12
      $region11: #{_conv_bn_impl.1} parent=5 // pred_region
        %s144 = ssub.s32 %s12, 1
        // Predicated region
        $region13: #{_conv_bn_impl.1} parent=11 // pred_check
          %p145 = pneg %p76
        $region14: #{_conv_bn_impl.1} parent=11 // pred_check_branch
          %147 = sbr.rel (%p145) target = $region16
        $region15: #{_conv_bn_impl.1} parent=11 // pred_region
          %p148 = scmp.lt.s32.totalorder %s22, 0
          %s149 = scalar_select %p148, %s22, 0
          %s150 = smul.addr %s149, 4
          %s151 = scalar_lea.vmem %s1, %s150
        $region16: #{_conv_bn_impl.1} parent=11 // pred_fallthru
          _
        // Predicated region
        $region17: #{_conv_bn_impl.1} parent=11 // pred_check
          %p152 = pneg %p102
        $region18: #{_conv_bn_impl.1} parent=11 // pred_check_branch
          %154 = sbr.rel (%p152) target = $region20
        $region19: #{_conv_bn_impl.1} parent=11 // pred_region
          %p155 = scmp.lt.s32.totalorder %s22, 0
          %s156 = scalar_select %p155, %s22, 0
          %s157 = smul.addr %s156, 2
          %s158 = scalar_lea.vmem %s2, %s157
        $region20: #{_conv_bn_impl.1} parent=11 // pred_fallthru
          _
      $region12: #{_conv_bn_impl.1} parent=5 // pred_fallthru
        _
      %p159 = scmp.lt.s32.totalorder %s12, 4
      // Predicated region
      $region21: #{_conv_bn_impl.1} parent=5 // pred_check
        %p160 = pneg %p159
      $region22: #{_conv_bn_impl.1} parent=5 // pred_check_branch
        %162 = sbr.rel (%p160) target = $region24
      $region23: #{_conv_bn_impl.1} parent=5 // pred_region
        // Predicated region
        $region25: #{_conv_bn_impl.1} parent=23 // pred_check
          %p163 = pneg %p44
        $region26: #{_conv_bn_impl.1} parent=23 // pred_check_branch
          %165 = sbr.rel (%p163) target = $region28
        $region27: #{_conv_bn_impl.1} parent=23 // pred_region
          %s166 = smul.u32 64, %s19
          %p167 = scmp.lt.s32.totalorder %s166, 255
          %s168 = scalar_select %p167, %s166, 255
          %s169 = smul.addr %s168, 2
          %s170 = smul.addr %s169, 4
          %s171 = scalar_lea.vmem %s0, %s170
          %s172 = smul.u32 64, %s19
        $region28: #{_conv_bn_impl.1} parent=23 // pred_fallthru
          _
      $region24: #{_conv_bn_impl.1} parent=5 // pred_fallthru
        _
      %p173 = scmp.le.s32.totalorder 1, %s12
      %p174 = scmp.lt.s32.totalorder %s12, 5
      %p175 = pnand %p173, %p174
      %p176 = pneg %p175
      // Predicated region
      $region29: #{_conv_bn_impl.1} parent=5 // pred_check
        _
      $region30: #{_conv_bn_impl.1} parent=5 // pred_check_branch
        %178 = sbr.rel (%p175) target = $region32
      $region31: #{_conv_bn_impl.1} parent=5 // pred_region
        %s179 = ssub.s32 %s12, 1
        %s180 = smul.u32 64, %s21
        %p181 = scmp.lt.s32.totalorder %s180, 255
        %s182 = scalar_select %p181, %s180, 255
        %s183 = smul.addr %s182, 2
        %s184 = smul.addr %s183, 4
        %s185 = scalar_lea.vmem %s0, %s184
        %p186 = pneg %p50
        %p187 = pneg %p47
        %p188 = scmp.lt.s32.totalorder %s22, 0
        %s189 = scalar_select %p188, %s22, 0
        %s190 = smul.addr %s189, 4
        %s191 = scalar_lea.vmem %s1, %s190
        %p192 = pneg %p76
        %p193 = pneg %p73
        %p194 = scmp.lt.s32.totalorder %s22, 0
        %s195 = scalar_select %p194, %s22, 0
        %s196 = smul.addr %s195, 2
        %s197 = scalar_lea.vmem %s2, %s196
        %p198 = pneg %p102
        %p199 = pneg %p99
        %p200 = pneg %p130
        %p201 = pneg %p127
        %s202 = sand.u32 %s117, 1
        %s203 = scalar_lea.sflag [#allocation3], %s202
        %s204 = sand.u32 %s117, 1
        %s205 = smul.addr %s204, 256
        %s206 = scalar_lea.vmem [#allocation2], %s205
        %s207 = smul.u32 64, %s21
        %p208 = scmp.lt.s32.totalorder %s207, 255
        %s209 = scalar_select %p208, %s207, 255
        %s210 = smul.addr %s209, 2
        %s211 = smul.addr %s210, 4
        %s212 = scalar_lea.vmem %s0, %s211
        %s213 = smul.u32 64, %s21
        %p214 = scmp.lt.s32.totalorder %s22, 0
        %s215 = scalar_select %p214, %s22, 0
        %s216 = smul.addr %s215, 4
        %s217 = scalar_lea.vmem %s1, %s216
        %p218 = scmp.lt.s32.totalorder %s22, 0
        %s219 = scalar_select %p218, %s22, 0
        %s220 = smul.addr %s219, 2
        %s221 = scalar_lea.vmem %s2, %s220
        %s222 = smul.u32 64, %s21
        %v224 = vld [vmem:[%s212] sm:$0xff]
        %v225 = vld [vmem:[%s212 + $0x8] sm:$0xff]
        %v226 = vld [vmem:[%s212 + $0x10] sm:$0xff]
        %v227 = vld [vmem:[%s212 + $0x18] sm:$0xff]
        %v228 = vld [vmem:[%s212 + $0x20] sm:$0xff]
        %v229 = vld [vmem:[%s212 + $0x28] sm:$0xff]
        %v230 = vld [vmem:[%s212 + $0x30] sm:$0xff]
        %v231 = vld [vmem:[%s212 + $0x38] sm:$0xff]
        %v232 = vld [vmem:[%s212 + $0x40] sm:$0xff]
        %v233 = vld [vmem:[%s212 + $0x48] sm:$0xff]
        %v234 = vld [vmem:[%s212 + $0x50] sm:$0xff]
        %v235 = vld [vmem:[%s212 + $0x58] sm:$0xff]
        %v236 = vld [vmem:[%s212 + $0x60] sm:$0xff]
        %v237 = vld [vmem:[%s212 + $0x68] sm:$0xff]
        %v238 = vld [vmem:[%s212 + $0x70] sm:$0xff]
        %v239 = vld [vmem:[%s212 + $0x78] sm:$0xff]
        %v240 = vld [vmem:[%s212 + $0x80] sm:$0xff]
        %v241 = vld [vmem:[%s212 + $0x88] sm:$0xff]
        %v242 = vld [vmem:[%s212 + $0x90] sm:$0xff]
        %v243 = vld [vmem:[%s212 + $0x98] sm:$0xff]
        %v244 = vld [vmem:[%s212 + $0xa0] sm:$0xff]
        %v245 = vld [vmem:[%s212 + $0xa8] sm:$0xff]
        %v246 = vld [vmem:[%s212 + $0xb0] sm:$0xff]
        %v247 = vld [vmem:[%s212 + $0xb8] sm:$0xff]
        %v248 = vld [vmem:[%s212 + $0xc0] sm:$0xff]
        %v249 = vld [vmem:[%s212 + $0xc8] sm:$0xff]
        %v250 = vld [vmem:[%s212 + $0xd0] sm:$0xff]
        %v251 = vld [vmem:[%s212 + $0xd8] sm:$0xff]
        %v252 = vld [vmem:[%s212 + $0xe0] sm:$0xff]
        %v253 = vld [vmem:[%s212 + $0xe8] sm:$0xff]
        %v254 = vld [vmem:[%s212 + $0xf0] sm:$0xff]
        %v255 = vld [vmem:[%s212 + $0xf8] sm:$0xff]
        %v256 = vld [vmem:[%s212 + $0x100] sm:$0xff]
        %v257 = vld [vmem:[%s212 + $0x108] sm:$0xff]
        %v258 = vld [vmem:[%s212 + $0x110] sm:$0xff]
        %v259 = vld [vmem:[%s212 + $0x118] sm:$0xff]
        %v260 = vld [vmem:[%s212 + $0x120] sm:$0xff]
        %v261 = vld [vmem:[%s212 + $0x128] sm:$0xff]
        %v262 = vld [vmem:[%s212 + $0x130] sm:$0xff]
        %v263 = vld [vmem:[%s212 + $0x138] sm:$0xff]
        %v264 = vld [vmem:[%s212 + $0x140] sm:$0xff]
        %v265 = vld [vmem:[%s212 + $0x148] sm:$0xff]
        %v266 = vld [vmem:[%s212 + $0x150] sm:$0xff]
        %v267 = vld [vmem:[%s212 + $0x158] sm:$0xff]
        %v268 = vld [vmem:[%s212 + $0x160] sm:$0xff]
        %v269 = vld [vmem:[%s212 + $0x168] sm:$0xff]
        %v270 = vld [vmem:[%s212 + $0x170] sm:$0xff]
        %v271 = vld [vmem:[%s212 + $0x178] sm:$0xff]
        %v272 = vld [vmem:[%s212 + $0x180] sm:$0xff]
        %v273 = vld [vmem:[%s212 + $0x188] sm:$0xff]
        %v274 = vld [vmem:[%s212 + $0x190] sm:$0xff]
        %v275 = vld [vmem:[%s212 + $0x198] sm:$0xff]
        %v276 = vld [vmem:[%s212 + $0x1a0] sm:$0xff]
        %v277 = vld [vmem:[%s212 + $0x1a8] sm:$0xff]
        %v278 = vld [vmem:[%s212 + $0x1b0] sm:$0xff]
        %v279 = vld [vmem:[%s212 + $0x1b8] sm:$0xff]
        %v280 = vld [vmem:[%s212 + $0x1c0] sm:$0xff]
        %v281 = vld [vmem:[%s212 + $0x1c8] sm:$0xff]
        %v282 = vld [vmem:[%s212 + $0x1d0] sm:$0xff]
        %v283 = vld [vmem:[%s212 + $0x1d8] sm:$0xff]
        %v284 = vld [vmem:[%s212 + $0x1e0] sm:$0xff]
        %v285 = vld [vmem:[%s212 + $0x1e8] sm:$0xff]
        %v286 = vld [vmem:[%s212 + $0x1f0] sm:$0xff]
        %v287 = vld [vmem:[%s212 + $0x1f8] sm:$0xff]
        %v288 = vld [vmem:[%s217] sm:$0xf]
        %v289 = vld [vmem:[%s217 + $0x4] sm:$0xf]
        %v290 = vld [vmem:[%s217 + $0x8] sm:$0xf]
        %v291 = vld [vmem:[%s217 + $0xc] sm:$0xf]
        %v292 = vld [vmem:[%s217 + $0x10] sm:$0xf]
        %v293 = vld [vmem:[%s217 + $0x14] sm:$0xf]
        %v294 = vld [vmem:[%s217 + $0x18] sm:$0xf]
        %v295 = vld [vmem:[%s217 + $0x1c] sm:$0xf]
        %v296 = vld [vmem:[%s217 + $0x20] sm:$0xf]
        %v297 = vld [vmem:[%s217 + $0x24] sm:$0xf]
        %v298 = vld [vmem:[%s217 + $0x28] sm:$0xf]
        %v299 = vld [vmem:[%s217 + $0x2c] sm:$0xf]
        %v300 = vld [vmem:[%s217 + $0x30] sm:$0xf]
        %v301 = vld [vmem:[%s217 + $0x34] sm:$0xf]
        %v302 = vld [vmem:[%s217 + $0x38] sm:$0xf]
        %v303 = vld [vmem:[%s217 + $0x3c] sm:$0xf]
        %v304 = vld [vmem:[%s217 + $0x40] sm:$0xf]
        %v305 = vld [vmem:[%s217 + $0x44] sm:$0xf]
        %v306 = vld [vmem:[%s217 + $0x48] sm:$0xf]
        %v307 = vld [vmem:[%s217 + $0x4c] sm:$0xf]
        %v308 = vld [vmem:[%s217 + $0x50] sm:$0xf]
        %v309 = vld [vmem:[%s217 + $0x54] sm:$0xf]
        %v310 = vld [vmem:[%s217 + $0x58] sm:$0xf]
        %v311 = vld [vmem:[%s217 + $0x5c] sm:$0xf]
        %v312 = vld [vmem:[%s217 + $0x60] sm:$0xf]
        %v313 = vld [vmem:[%s217 + $0x64] sm:$0xf]
        %v314 = vld [vmem:[%s217 + $0x68] sm:$0xf]
        %v315 = vld [vmem:[%s217 + $0x6c] sm:$0xf]
        %v316 = vld [vmem:[%s217 + $0x70] sm:$0xf]
        %v317 = vld [vmem:[%s217 + $0x74] sm:$0xf]
        %v318 = vld [vmem:[%s217 + $0x78] sm:$0xf]
        %v319 = vld [vmem:[%s217 + $0x7c] sm:$0xf]
        %v384 = vunpack.c.l.b16 %v224
        %v385 = vunpack.c.h.b16 %v224
        %v386 = vunpack.c.l.b16 %v225
        %v387 = vunpack.c.h.b16 %v225
        %v388 = vunpack.c.l.b16 %v226
        %v389 = vunpack.c.h.b16 %v226
        %v390 = vunpack.c.l.b16 %v227
        %v391 = vunpack.c.h.b16 %v227
        %v392 = vunpack.c.l.b16 %v228
        %v393 = vunpack.c.h.b16 %v228
        %v394 = vunpack.c.l.b16 %v229
        %v395 = vunpack.c.h.b16 %v229
        %v396 = vunpack.c.l.b16 %v230
        %v397 = vunpack.c.h.b16 %v230
        %v398 = vunpack.c.l.b16 %v231
        %v399 = vunpack.c.h.b16 %v231
        %v400 = vunpack.c.l.b16 %v232
        %v401 = vunpack.c.h.b16 %v232
        %v402 = vunpack.c.l.b16 %v233
        %v403 = vunpack.c.h.b16 %v233
        %v404 = vunpack.c.l.b16 %v234
        %v405 = vunpack.c.h.b16 %v234
        %v406 = vunpack.c.l.b16 %v235
        %v407 = vunpack.c.h.b16 %v235
        %v408 = vunpack.c.l.b16 %v236
        %v409 = vunpack.c.h.b16 %v236
        %v410 = vunpack.c.l.b16 %v237
        %v411 = vunpack.c.h.b16 %v237
        %v412 = vunpack.c.l.b16 %v238
        %v413 = vunpack.c.h.b16 %v238
        %v414 = vunpack.c.l.b16 %v239
        %v415 = vunpack.c.h.b16 %v239
        %v416 = vunpack.c.l.b16 %v240
        %v417 = vunpack.c.h.b16 %v240
        %v418 = vunpack.c.l.b16 %v241
        %v419 = vunpack.c.h.b16 %v241
        %v420 = vunpack.c.l.b16 %v242
        %v421 = vunpack.c.h.b16 %v242
        %v422 = vunpack.c.l.b16 %v243
        %v423 = vunpack.c.h.b16 %v243
        %v424 = vunpack.c.l.b16 %v244
        %v425 = vunpack.c.h.b16 %v244
        %v426 = vunpack.c.l.b16 %v245
        %v427 = vunpack.c.h.b16 %v245
        %v428 = vunpack.c.l.b16 %v246
        %v429 = vunpack.c.h.b16 %v246
        %v430 = vunpack.c.l.b16 %v247
        %v431 = vunpack.c.h.b16 %v247
        %v432 = vunpack.c.l.b16 %v248
        %v433 = vunpack.c.h.b16 %v248
        %v434 = vunpack.c.l.b16 %v249
        %v435 = vunpack.c.h.b16 %v249
        %v436 = vunpack.c.l.b16 %v250
        %v437 = vunpack.c.h.b16 %v250
        %v438 = vunpack.c.l.b16 %v251
        %v439 = vunpack.c.h.b16 %v251
        %v440 = vunpack.c.l.b16 %v252
        %v441 = vunpack.c.h.b16 %v252
        %v442 = vunpack.c.l.b16 %v253
        %v443 = vunpack.c.h.b16 %v253
        %v444 = vunpack.c.l.b16 %v254
        %v445 = vunpack.c.h.b16 %v254
        %v446 = vunpack.c.l.b16 %v255
        %v447 = vunpack.c.h.b16 %v255
        %v448 = vunpack.c.l.b16 %v256
        %v449 = vunpack.c.h.b16 %v256
        %v450 = vunpack.c.l.b16 %v257
        %v451 = vunpack.c.h.b16 %v257
        %v452 = vunpack.c.l.b16 %v258
        %v453 = vunpack.c.h.b16 %v258
        %v454 = vunpack.c.l.b16 %v259
        %v455 = vunpack.c.h.b16 %v259
        %v456 = vunpack.c.l.b16 %v260
        %v457 = vunpack.c.h.b16 %v260
        %v458 = vunpack.c.l.b16 %v261
        %v459 = vunpack.c.h.b16 %v261
        %v460 = vunpack.c.l.b16 %v262
        %v461 = vunpack.c.h.b16 %v262
        %v462 = vunpack.c.l.b16 %v263
        %v463 = vunpack.c.h.b16 %v263
        %v464 = vunpack.c.l.b16 %v264
        %v465 = vunpack.c.h.b16 %v264
        %v466 = vunpack.c.l.b16 %v265
        %v467 = vunpack.c.h.b16 %v265
        %v468 = vunpack.c.l.b16 %v266
        %v469 = vunpack.c.h.b16 %v266
        %v470 = vunpack.c.l.b16 %v267
        %v471 = vunpack.c.h.b16 %v267
        %v472 = vunpack.c.l.b16 %v268
        %v473 = vunpack.c.h.b16 %v268
        %v474 = vunpack.c.l.b16 %v269
        %v475 = vunpack.c.h.b16 %v269
        %v476 = vunpack.c.l.b16 %v270
        %v477 = vunpack.c.h.b16 %v270
        %v478 = vunpack.c.l.b16 %v271
        %v479 = vunpack.c.h.b16 %v271
        %v480 = vunpack.c.l.b16 %v272
        %v481 = vunpack.c.h.b16 %v272
        %v482 = vunpack.c.l.b16 %v273
        %v483 = vunpack.c.h.b16 %v273
        %v484 = vunpack.c.l.b16 %v274
        %v485 = vunpack.c.h.b16 %v274
        %v486 = vunpack.c.l.b16 %v275
        %v487 = vunpack.c.h.b16 %v275
        %v488 = vunpack.c.l.b16 %v276
        %v489 = vunpack.c.h.b16 %v276
        %v490 = vunpack.c.l.b16 %v277
        %v491 = vunpack.c.h.b16 %v277
        %v492 = vunpack.c.l.b16 %v278
        %v493 = vunpack.c.h.b16 %v278
        %v494 = vunpack.c.l.b16 %v279
        %v495 = vunpack.c.h.b16 %v279
        %v496 = vunpack.c.l.b16 %v280
        %v497 = vunpack.c.h.b16 %v280
        %v498 = vunpack.c.l.b16 %v281
        %v499 = vunpack.c.h.b16 %v281
        %v500 = vunpack.c.l.b16 %v282
        %v501 = vunpack.c.h.b16 %v282
        %v502 = vunpack.c.l.b16 %v283
        %v503 = vunpack.c.h.b16 %v283
        %v504 = vunpack.c.l.b16 %v284
        %v505 = vunpack.c.h.b16 %v284
        %v506 = vunpack.c.l.b16 %v285
        %v507 = vunpack.c.h.b16 %v285
        %v508 = vunpack.c.l.b16 %v286
        %v509 = vunpack.c.h.b16 %v286
        %v510 = vunpack.c.l.b16 %v287
        %v511 = vunpack.c.h.b16 %v287
        %v512 = vpack.c.b16 %v386, %v384
        %v513 = vpack.c.b16 %v387, %v385
        %v514 = vpack.c.b16 %v390, %v388
        %v515 = vpack.c.b16 %v391, %v389
        %v516 = vpack.c.b16 %v394, %v392
        %v517 = vpack.c.b16 %v395, %v393
        %v518 = vpack.c.b16 %v398, %v396
        %v519 = vpack.c.b16 %v399, %v397
        %v520 = vpack.c.b16 %v402, %v400
        %v521 = vpack.c.b16 %v403, %v401
        %v522 = vpack.c.b16 %v406, %v404
        %v523 = vpack.c.b16 %v407, %v405
        %v524 = vpack.c.b16 %v410, %v408
        %v525 = vpack.c.b16 %v411, %v409
        %v526 = vpack.c.b16 %v414, %v412
        %v527 = vpack.c.b16 %v415, %v413
        %v528 = vpack.c.b16 %v418, %v416
        %v529 = vpack.c.b16 %v419, %v417
        %v530 = vpack.c.b16 %v422, %v420
        %v531 = vpack.c.b16 %v423, %v421
        %v532 = vpack.c.b16 %v426, %v424
        %v533 = vpack.c.b16 %v427, %v425
        %v534 = vpack.c.b16 %v430, %v428
        %v535 = vpack.c.b16 %v431, %v429
        %v536 = vpack.c.b16 %v434, %v432
        %v537 = vpack.c.b16 %v435, %v433
        %v538 = vpack.c.b16 %v438, %v436
        %v539 = vpack.c.b16 %v439, %v437
        %v540 = vpack.c.b16 %v442, %v440
        %v541 = vpack.c.b16 %v443, %v441
        %v542 = vpack.c.b16 %v446, %v444
        %v543 = vpack.c.b16 %v447, %v445
        %v544 = vpack.c.b16 %v450, %v448
        %v545 = vpack.c.b16 %v451, %v449
        %v546 = vpack.c.b16 %v454, %v452
        %v547 = vpack.c.b16 %v455, %v453
        %v548 = vpack.c.b16 %v458, %v456
        %v549 = vpack.c.b16 %v459, %v457
        %v550 = vpack.c.b16 %v462, %v460
        %v551 = vpack.c.b16 %v463, %v461
        %v552 = vpack.c.b16 %v466, %v464
        %v553 = vpack.c.b16 %v467, %v465
        %v554 = vpack.c.b16 %v470, %v468
        %v555 = vpack.c.b16 %v471, %v469
        %v556 = vpack.c.b16 %v474, %v472
        %v557 = vpack.c.b16 %v475, %v473
        %v558 = vpack.c.b16 %v478, %v476
        %v559 = vpack.c.b16 %v479, %v477
        %v560 = vpack.c.b16 %v482, %v480
        %v561 = vpack.c.b16 %v483, %v481
        %v562 = vpack.c.b16 %v486, %v484
        %v563 = vpack.c.b16 %v487, %v485
        %v564 = vpack.c.b16 %v490, %v488
        %v565 = vpack.c.b16 %v491, %v489
        %v566 = vpack.c.b16 %v494, %v492
        %v567 = vpack.c.b16 %v495, %v493
        %v568 = vpack.c.b16 %v498, %v496
        %v569 = vpack.c.b16 %v499, %v497
        %v570 = vpack.c.b16 %v502, %v500
        %v571 = vpack.c.b16 %v503, %v501
        %v572 = vpack.c.b16 %v506, %v504
        %v573 = vpack.c.b16 %v507, %v505
        %v574 = vpack.c.b16 %v510, %v508
        %v575 = vpack.c.b16 %v511, %v509
        %v672 = vunpack.c.l.b16 %v288
        %v673 = vunpack.c.l.b16 %v289
        %v674 = vunpack.c.l.b16 %v290
        %v675 = vunpack.c.l.b16 %v291
        %v676 = vunpack.c.l.b16 %v292
        %v677 = vunpack.c.l.b16 %v293
        %v678 = vunpack.c.l.b16 %v294
        %v679 = vunpack.c.l.b16 %v295
        %v680 = vunpack.c.l.b16 %v296
        %v681 = vunpack.c.l.b16 %v297
        %v682 = vunpack.c.l.b16 %v298
        %v683 = vunpack.c.l.b16 %v299
        %v684 = vunpack.c.l.b16 %v300
        %v685 = vunpack.c.l.b16 %v301
        %v686 = vunpack.c.l.b16 %v302
        %v687 = vunpack.c.l.b16 %v303
        %v688 = vunpack.c.l.b16 %v304
        %v689 = vunpack.c.l.b16 %v305
        %v690 = vunpack.c.l.b16 %v306
        %v691 = vunpack.c.l.b16 %v307
        %v692 = vunpack.c.l.b16 %v308
        %v693 = vunpack.c.l.b16 %v309
        %v694 = vunpack.c.l.b16 %v310
        %v695 = vunpack.c.l.b16 %v311
        %v696 = vunpack.c.l.b16 %v312
        %v697 = vunpack.c.l.b16 %v313
        %v698 = vunpack.c.l.b16 %v314
        %v699 = vunpack.c.l.b16 %v315
        %v700 = vunpack.c.l.b16 %v316
        %v701 = vunpack.c.l.b16 %v317
        %v702 = vunpack.c.l.b16 %v318
        %v703 = vunpack.c.l.b16 %v319
        %v704 = vpack.c.b16 %v673, %v672
        %v705 = vpack.c.b16 %v675, %v674
        %v706 = vpack.c.b16 %v677, %v676
        %v707 = vpack.c.b16 %v679, %v678
        %v708 = vpack.c.b16 %v681, %v680
        %v709 = vpack.c.b16 %v683, %v682
        %v710 = vpack.c.b16 %v685, %v684
        %v711 = vpack.c.b16 %v687, %v686
        %v712 = vpack.c.b16 %v689, %v688
        %v713 = vpack.c.b16 %v691, %v690
        %v714 = vpack.c.b16 %v693, %v692
        %v715 = vpack.c.b16 %v695, %v694
        %v716 = vpack.c.b16 %v697, %v696
        %v717 = vpack.c.b16 %v699, %v698
        %v718 = vpack.c.b16 %v701, %v700
        %v719 = vpack.c.b16 %v703, %v702
        %736 = vmatprep.subr.bf16.mxu0 0
        %737 = vmatpush1.bf16.msra.mxu0 %v704
        %738 = vmatprep.subr.bf16.mxu0 0
        %739 = vmatpush1.bf16.msra.mxu0 %v705
        %740 = vmatprep.subr.bf16.mxu0 0
        %741 = vmatpush1.bf16.msra.mxu0 %v706
        %742 = vmatprep.subr.bf16.mxu0 0
        %743 = vmatpush1.bf16.msra.mxu0 %v707
        %744 = vmatprep.subr.bf16.mxu0 0
        %745 = vmatpush1.bf16.msra.mxu0 %v708
        %746 = vmatprep.subr.bf16.mxu0 0
        %747 = vmatpush1.bf16.msra.mxu0 %v709
        %748 = vmatprep.subr.bf16.mxu0 0
        %749 = vmatpush1.bf16.msra.mxu0 %v710
        %750 = vmatprep.subr.bf16.mxu0 0
        %751 = vmatpush1.bf16.msra.mxu0 %v711
        %752 = vmatprep.subr.bf16.mxu0 0
        %753 = vmatpush1.bf16.msra.mxu0 %v712
        %754 = vmatprep.subr.bf16.mxu0 0
        %755 = vmatpush1.bf16.msra.mxu0 %v713
        %756 = vmatprep.subr.bf16.mxu0 0
        %757 = vmatpush1.bf16.msra.mxu0 %v714
        %758 = vmatprep.subr.bf16.mxu0 0
        %759 = vmatpush1.bf16.msra.mxu0 %v715
        %760 = vmatprep.subr.bf16.mxu0 0
        %761 = vmatpush1.bf16.msra.mxu0 %v716
        %762 = vmatprep.subr.bf16.mxu0 0
        %763 = vmatpush1.bf16.msra.mxu0 %v717
        %764 = vmatprep.subr.bf16.mxu0 0
        %765 = vmatpush1.bf16.msra.mxu0 %v718
        %766 = vmatprep.subr.bf16.mxu0 0
        %767 = vmatpush1.bf16.msra.mxu0 %v719
        %768 = vmatprep.mubr.bf16.mxu0 %v513
        %769 = vmatmul.mubr.bf16.gmra.mrb[0].mxu0 %v512
        %v770 = vpop.f32.mrb[0].mxu0
        %v771 = vadd.f32 0.0, %v770
        %v772 = vpop.f32.mrb[0].mxu0
        %v773 = vpop.f32.mrb[0].mxu0
        %v774 = vadd.f32 0.0, %v773
        %v775 = vpop.f32.mrb[0].mxu0
        %776 = vmatprep.mubr.bf16.mxu0 %v515
        %777 = vmatmul.mubr.bf16.gmra.mrb[0].mxu0 %v514
        %v778 = vpop.f32.mrb[0].mxu0
        %v779 = vadd.f32 0.0, %v778
        %v780 = vpop.f32.mrb[0].mxu0
        %v781 = vpop.f32.mrb[0].mxu0
        %v782 = vadd.f32 0.0, %v781
        %v783 = vpop.f32.mrb[0].mxu0
        %784 = vmatprep.mubr.bf16.mxu0 %v517
        %785 = vmatmul.mubr.bf16.gmra.mrb[0].mxu0 %v516
        %v786 = vpop.f32.mrb[0].mxu0
        %v787 = vadd.f32 0.0, %v786
        %v788 = vpop.f32.mrb[0].mxu0
        %v789 = vpop.f32.mrb[0].mxu0
        %v790 = vadd.f32 0.0, %v789
        %v791 = vpop.f32.mrb[0].mxu0
        %792 = vmatprep.mubr.bf16.mxu0 %v519
        %793 = vmatmul.mubr.bf16.gmra.mrb[0].mxu0 %v518
        %v794 = vpop.f32.mrb[0].mxu0
        %v795 = vadd.f32 0.0, %v794
        %v796 = vpop.f32.mrb[0].mxu0
        %v797 = vpop.f32.mrb[0].mxu0
        %v798 = vadd.f32 0.0, %v797
        %v799 = vpop.f32.mrb[0].mxu0
        %800 = vmatprep.mubr.bf16.mxu0 %v521
        %801 = vmatmul.mubr.bf16.gmra.mrb[0].mxu0 %v520
        %v802 = vpop.f32.mrb[0].mxu0
        %v803 = vadd.f32 0.0, %v802
        %v804 = vpop.f32.mrb[0].mxu0
        %v805 = vpop.f32.mrb[0].mxu0
        %v806 = vadd.f32 0.0, %v805
        %v807 = vpop.f32.mrb[0].mxu0
        %808 = vmatprep.mubr.bf16.mxu0 %v523
        %809 = vmatmul.mubr.bf16.gmra.mrb[0].mxu0 %v522
        %v810 = vpop.f32.mrb[0].mxu0
        %v811 = vadd.f32 0.0, %v810
        %v812 = vpop.f32.mrb[0].mxu0
        %v813 = vpop.f32.mrb[0].mxu0
        %v814 = vadd.f32 0.0, %v813
        %v815 = vpop.f32.mrb[0].mxu0
        %816 = vmatprep.mubr.bf16.mxu0 %v525
        %817 = vmatmul.mubr.bf16.gmra.mrb[0].mxu0 %v524
        %v818 = vpop.f32.mrb[0].mxu0
        %v819 = vadd.f32 0.0, %v818
        %v820 = vpop.f32.mrb[0].mxu0
        %v821 = vpop.f32.mrb[0].mxu0
        %v822 = vadd.f32 0.0, %v821
        %v823 = vpop.f32.mrb[0].mxu0
        %824 = vmatprep.mubr.bf16.mxu0 %v527
        %825 = vmatmul.mubr.bf16.gmra.mrb[0].mxu0 %v526
        %v826 = vpop.f32.mrb[0].mxu0
        %v827 = vadd.f32 0.0, %v826
        %v828 = vpop.f32.mrb[0].mxu0
        %v829 = vpop.f32.mrb[0].mxu0
        %v830 = vadd.f32 0.0, %v829
        %v831 = vpop.f32.mrb[0].mxu0
        %832 = vmatprep.mubr.bf16.mxu0 %v529
        %833 = vmatmul.mubr.bf16.gmra.mrb[0].mxu0 %v528
        %v834 = vpop.f32.mrb[0].mxu0
        %v835 = vadd.f32 0.0, %v834
        %v836 = vpop.f32.mrb[0].mxu0
        %v837 = vpop.f32.mrb[0].mxu0
        %v838 = vadd.f32 0.0, %v837
        %v839 = vpop.f32.mrb[0].mxu0
        %840 = vmatprep.mubr.bf16.mxu0 %v531
        %841 = vmatmul.mubr.bf16.gmra.mrb[0].mxu0 %v530
        %v842 = vpop.f32.mrb[0].mxu0
        %v843 = vadd.f32 0.0, %v842
        %v844 = vpop.f32.mrb[0].mxu0
        %v845 = vpop.f32.mrb[0].mxu0
        %v846 = vadd.f32 0.0, %v845
        %v847 = vpop.f32.mrb[0].mxu0
        %848 = vmatprep.mubr.bf16.mxu0 %v533
        %849 = vmatmul.mubr.bf16.gmra.mrb[0].mxu0 %v532
        %v850 = vpop.f32.mrb[0].mxu0
        %v851 = vadd.f32 0.0, %v850
        %v852 = vpop.f32.mrb[0].mxu0
        %v853 = vpop.f32.mrb[0].mxu0
        %v854 = vadd.f32 0.0, %v853
        %v855 = vpop.f32.mrb[0].mxu0
        %856 = vmatprep.mubr.bf16.mxu0 %v535
        %857 = vmatmul.mubr.bf16.gmra.mrb[0].mxu0 %v534
        %v858 = vpop.f32.mrb[0].mxu0
        %v859 = vadd.f32 0.0, %v858
        %v860 = vpop.f32.mrb[0].mxu0
        %v861 = vpop.f32.mrb[0].mxu0
        %v862 = vadd.f32 0.0, %v861
        %v863 = vpop.f32.mrb[0].mxu0
        %864 = vmatprep.mubr.bf16.mxu0 %v537
        %865 = vmatmul.mubr.bf16.gmra.mrb[0].mxu0 %v536
        %v866 = vpop.f32.mrb[0].mxu0
        %v867 = vadd.f32 0.0, %v866
        %v868 = vpop.f32.mrb[0].mxu0
        %v869 = vpop.f32.mrb[0].mxu0
        %v870 = vadd.f32 0.0, %v869
        %v871 = vpop.f32.mrb[0].mxu0
        %872 = vmatprep.mubr.bf16.mxu0 %v539
        %873 = vmatmul.mubr.bf16.gmra.mrb[0].mxu0 %v538
        %v874 = vpop.f32.mrb[0].mxu0
        %v875 = vadd.f32 0.0, %v874
        %v876 = vpop.f32.mrb[0].mxu0
        %v877 = vpop.f32.mrb[0].mxu0
        %v878 = vadd.f32 0.0, %v877
        %v879 = vpop.f32.mrb[0].mxu0
        %880 = vmatprep.mubr.bf16.mxu0 %v541
        %881 = vmatmul.mubr.bf16.gmra.mrb[0].mxu0 %v540
        %v882 = vpop.f32.mrb[0].mxu0
        %v883 = vadd.f32 0.0, %v882
        %v884 = vpop.f32.mrb[0].mxu0
        %v885 = vpop.f32.mrb[0].mxu0
        %v886 = vadd.f32 0.0, %v885
        %v887 = vpop.f32.mrb[0].mxu0
        %888 = vmatprep.mubr.bf16.mxu0 %v543
        %889 = vmatmul.mubr.bf16.gmra.mrb[0].mxu0 %v542
        %v890 = vpop.f32.mrb[0].mxu0
        %v891 = vadd.f32 0.0, %v890
        %v892 = vpop.f32.mrb[0].mxu0
        %v893 = vpop.f32.mrb[0].mxu0
        %v894 = vadd.f32 0.0, %v893
        %v895 = vpop.f32.mrb[0].mxu0
        %896 = vmatprep.mubr.bf16.mxu0 %v545
        %897 = vmatmul.mubr.bf16.gmra.mrb[0].mxu0 %v544
        %v898 = vpop.f32.mrb[0].mxu0
        %v899 = vadd.f32 0.0, %v898
        %v900 = vpop.f32.mrb[0].mxu0
        %v901 = vpop.f32.mrb[0].mxu0
        %v902 = vadd.f32 0.0, %v901
        %v903 = vpop.f32.mrb[0].mxu0
        %904 = vmatprep.mubr.bf16.mxu0 %v547
        %905 = vmatmul.mubr.bf16.gmra.mrb[0].mxu0 %v546
        %v906 = vpop.f32.mrb[0].mxu0
        %v907 = vadd.f32 0.0, %v906
        %v908 = vpop.f32.mrb[0].mxu0
        %v909 = vpop.f32.mrb[0].mxu0
        %v910 = vadd.f32 0.0, %v909
        %v911 = vpop.f32.mrb[0].mxu0
        %912 = vmatprep.mubr.bf16.mxu0 %v549
        %913 = vmatmul.mubr.bf16.gmra.mrb[0].mxu0 %v548
        %v914 = vpop.f32.mrb[0].mxu0
        %v915 = vadd.f32 0.0, %v914
        %v916 = vpop.f32.mrb[0].mxu0
        %v917 = vpop.f32.mrb[0].mxu0
        %v918 = vadd.f32 0.0, %v917
        %v919 = vpop.f32.mrb[0].mxu0
        %920 = vmatprep.mubr.bf16.mxu0 %v551
        %921 = vmatmul.mubr.bf16.gmra.mrb[0].mxu0 %v550
        %v922 = vpop.f32.mrb[0].mxu0
        %v923 = vadd.f32 0.0, %v922
        %v924 = vpop.f32.mrb[0].mxu0
        %v925 = vpop.f32.mrb[0].mxu0
        %v926 = vadd.f32 0.0, %v925
        %v927 = vpop.f32.mrb[0].mxu0
        %928 = vmatprep.mubr.bf16.mxu0 %v553
        %929 = vmatmul.mubr.bf16.gmra.mrb[0].mxu0 %v552
        %v930 = vpop.f32.mrb[0].mxu0
        %v931 = vadd.f32 0.0, %v930
        %v932 = vpop.f32.mrb[0].mxu0
        %v933 = vpop.f32.mrb[0].mxu0
        %v934 = vadd.f32 0.0, %v933
        %v935 = vpop.f32.mrb[0].mxu0
        %936 = vmatprep.mubr.bf16.mxu0 %v555
        %937 = vmatmul.mubr.bf16.gmra.mrb[0].mxu0 %v554
        %v938 = vpop.f32.mrb[0].mxu0
        %v939 = vadd.f32 0.0, %v938
        %v940 = vpop.f32.mrb[0].mxu0
        %v941 = vpop.f32.mrb[0].mxu0
        %v942 = vadd.f32 0.0, %v941
        %v943 = vpop.f32.mrb[0].mxu0
        %944 = vmatprep.mubr.bf16.mxu0 %v557
        %945 = vmatmul.mubr.bf16.gmra.mrb[0].mxu0 %v556
        %v946 = vpop.f32.mrb[0].mxu0
        %v947 = vadd.f32 0.0, %v946
        %v948 = vpop.f32.mrb[0].mxu0
        %v949 = vpop.f32.mrb[0].mxu0
        %v950 = vadd.f32 0.0, %v949
        %v951 = vpop.f32.mrb[0].mxu0
        %952 = vmatprep.mubr.bf16.mxu0 %v559
        %953 = vmatmul.mubr.bf16.gmra.mrb[0].mxu0 %v558
        %v954 = vpop.f32.mrb[0].mxu0
        %v955 = vadd.f32 0.0, %v954
        %v956 = vpop.f32.mrb[0].mxu0
        %v957 = vpop.f32.mrb[0].mxu0
        %v958 = vadd.f32 0.0, %v957
        %v959 = vpop.f32.mrb[0].mxu0
        %960 = vmatprep.mubr.bf16.mxu0 %v561
        %961 = vmatmul.mubr.bf16.gmra.mrb[0].mxu0 %v560
        %v962 = vpop.f32.mrb[0].mxu0
        %v963 = vadd.f32 0.0, %v962
        %v964 = vpop.f32.mrb[0].mxu0
        %v965 = vpop.f32.mrb[0].mxu0
        %v966 = vadd.f32 0.0, %v965
        %v967 = vpop.f32.mrb[0].mxu0
        %968 = vmatprep.mubr.bf16.mxu0 %v563
        %969 = vmatmul.mubr.bf16.gmra.mrb[0].mxu0 %v562
        %v970 = vpop.f32.mrb[0].mxu0
        %v971 = vadd.f32 0.0, %v970
        %v972 = vpop.f32.mrb[0].mxu0
        %v973 = vpop.f32.mrb[0].mxu0
        %v974 = vadd.f32 0.0, %v973
        %v975 = vpop.f32.mrb[0].mxu0
        %976 = vmatprep.mubr.bf16.mxu0 %v565
        %977 = vmatmul.mubr.bf16.gmra.mrb[0].mxu0 %v564
        %v978 = vpop.f32.mrb[0].mxu0
        %v979 = vadd.f32 0.0, %v978
        %v980 = vpop.f32.mrb[0].mxu0
        %v981 = vpop.f32.mrb[0].mxu0
        %v982 = vadd.f32 0.0, %v981
        %v983 = vpop.f32.mrb[0].mxu0
        %984 = vmatprep.mubr.bf16.mxu0 %v567
        %985 = vmatmul.mubr.bf16.gmra.mrb[0].mxu0 %v566
        %v986 = vpop.f32.mrb[0].mxu0
        %v987 = vadd.f32 0.0, %v986
        %v988 = vpop.f32.mrb[0].mxu0
        %v989 = vpop.f32.mrb[0].mxu0
        %v990 = vadd.f32 0.0, %v989
        %v991 = vpop.f32.mrb[0].mxu0
        %992 = vmatprep.mubr.bf16.mxu0 %v569
        %993 = vmatmul.mubr.bf16.gmra.mrb[0].mxu0 %v568
        %v994 = vpop.f32.mrb[0].mxu0
        %v995 = vadd.f32 0.0, %v994
        %v996 = vpop.f32.mrb[0].mxu0
        %v997 = vpop.f32.mrb[0].mxu0
        %v998 = vadd.f32 0.0, %v997
        %v999 = vpop.f32.mrb[0].mxu0
        %1000 = vmatprep.mubr.bf16.mxu0 %v571
        %1001 = vmatmul.mubr.bf16.gmra.mrb[0].mxu0 %v570
        %v1002 = vpop.f32.mrb[0].mxu0
        %v1003 = vadd.f32 0.0, %v1002
        %v1004 = vpop.f32.mrb[0].mxu0
        %v1005 = vpop.f32.mrb[0].mxu0
        %v1006 = vadd.f32 0.0, %v1005
        %v1007 = vpop.f32.mrb[0].mxu0
        %1008 = vmatprep.mubr.bf16.mxu0 %v573
        %1009 = vmatmul.mubr.bf16.gmra.mrb[0].mxu0 %v572
        %v1010 = vpop.f32.mrb[0].mxu0
        %v1011 = vadd.f32 0.0, %v1010
        %v1012 = vpop.f32.mrb[0].mxu0
        %v1013 = vpop.f32.mrb[0].mxu0
        %v1014 = vadd.f32 0.0, %v1013
        %v1015 = vpop.f32.mrb[0].mxu0
        %1016 = vmatprep.mubr.bf16.mxu0 %v575
        %1017 = vmatmul.mubr.bf16.gmra.mrb[0].mxu0 %v574
        %v1018 = vpop.f32.mrb[0].mxu0
        %v1019 = vadd.f32 0.0, %v1018
        %v1020 = vpop.f32.mrb[0].mxu0
        %v1021 = vpop.f32.mrb[0].mxu0
        %v1022 = vadd.f32 0.0, %v1021
        %v1023 = vpop.f32.mrb[0].mxu0
        %1024 = vdwg.mxu0
        %v1025 = vld [vmem:[%s221] sm:$0x1]
        %v1026 = vlaneseq
        %v1027 = vshrl.u32 %v1026, 7
        %v1028 = vsub.s32 0, %v1027
        %v1029 = vrot.slane %v1025, %v1028
        %v1030 = vmul.f32 %v771, %v1029
        %v1031 = vmul.f32 %v774, %v1029
        %v1032 = vmul.f32 %v779, %v1029
        %v1033 = vmul.f32 %v782, %v1029
        %v1034 = vmul.f32 %v787, %v1029
        %v1035 = vmul.f32 %v790, %v1029
        %v1036 = vmul.f32 %v795, %v1029
        %v1037 = vmul.f32 %v798, %v1029
        %v1038 = vmul.f32 %v803, %v1029
        %v1039 = vmul.f32 %v806, %v1029
        %v1040 = vmul.f32 %v811, %v1029
        %v1041 = vmul.f32 %v814, %v1029
        %v1042 = vmul.f32 %v819, %v1029
        %v1043 = vmul.f32 %v822, %v1029
        %v1044 = vmul.f32 %v827, %v1029
        %v1045 = vmul.f32 %v830, %v1029
        %v1046 = vmul.f32 %v835, %v1029
        %v1047 = vmul.f32 %v838, %v1029
        %v1048 = vmul.f32 %v843, %v1029
        %v1049 = vmul.f32 %v846, %v1029
        %v1050 = vmul.f32 %v851, %v1029
        %v1051 = vmul.f32 %v854, %v1029
        %v1052 = vmul.f32 %v859, %v1029
        %v1053 = vmul.f32 %v862, %v1029
        %v1054 = vmul.f32 %v867, %v1029
        %v1055 = vmul.f32 %v870, %v1029
        %v1056 = vmul.f32 %v875, %v1029
        %v1057 = vmul.f32 %v878, %v1029
        %v1058 = vmul.f32 %v883, %v1029
        %v1059 = vmul.f32 %v886, %v1029
        %v1060 = vmul.f32 %v891, %v1029
        %v1061 = vmul.f32 %v894, %v1029
        %v1062 = vmul.f32 %v899, %v1029
        %v1063 = vmul.f32 %v902, %v1029
        %v1064 = vmul.f32 %v907, %v1029
        %v1065 = vmul.f32 %v910, %v1029
        %v1066 = vmul.f32 %v915, %v1029
        %v1067 = vmul.f32 %v918, %v1029
        %v1068 = vmul.f32 %v923, %v1029
        %v1069 = vmul.f32 %v926, %v1029
        %v1070 = vmul.f32 %v931, %v1029
        %v1071 = vmul.f32 %v934, %v1029
        %v1072 = vmul.f32 %v939, %v1029
        %v1073 = vmul.f32 %v942, %v1029
        %v1074 = vmul.f32 %v947, %v1029
        %v1075 = vmul.f32 %v950, %v1029
        %v1076 = vmul.f32 %v955, %v1029
        %v1077 = vmul.f32 %v958, %v1029
        %v1078 = vmul.f32 %v963, %v1029
        %v1079 = vmul.f32 %v966, %v1029
        %v1080 = vmul.f32 %v971, %v1029
        %v1081 = vmul.f32 %v974, %v1029
        %v1082 = vmul.f32 %v979, %v1029
        %v1083 = vmul.f32 %v982, %v1029
        %v1084 = vmul.f32 %v987, %v1029
        %v1085 = vmul.f32 %v990, %v1029
        %v1086 = vmul.f32 %v995, %v1029
        %v1087 = vmul.f32 %v998, %v1029
        %v1088 = vmul.f32 %v1003, %v1029
        %v1089 = vmul.f32 %v1006, %v1029
        %v1090 = vmul.f32 %v1011, %v1029
        %v1091 = vmul.f32 %v1014, %v1029
        %v1092 = vmul.f32 %v1019, %v1029
        %v1093 = vmul.f32 %v1022, %v1029
        %v1094 = vld [vmem:[%s221 + $0x1] sm:$0x1]
        %v1095 = vlaneseq
        %v1096 = vshrl.u32 %v1095, 7
        %v1097 = vsub.s32 0, %v1096
        %v1098 = vrot.slane %v1094, %v1097
        %v1099 = vadd.f32 %v1030, %v1098
        %v1100 = vadd.f32 %v1031, %v1098
        %v1101 = vadd.f32 %v1032, %v1098
        %v1102 = vadd.f32 %v1033, %v1098
        %v1103 = vadd.f32 %v1034, %v1098
        %v1104 = vadd.f32 %v1035, %v1098
        %v1105 = vadd.f32 %v1036, %v1098
        %v1106 = vadd.f32 %v1037, %v1098
        %v1107 = vadd.f32 %v1038, %v1098
        %v1108 = vadd.f32 %v1039, %v1098
        %v1109 = vadd.f32 %v1040, %v1098
        %v1110 = vadd.f32 %v1041, %v1098
        %v1111 = vadd.f32 %v1042, %v1098
        %v1112 = vadd.f32 %v1043, %v1098
        %v1113 = vadd.f32 %v1044, %v1098
        %v1114 = vadd.f32 %v1045, %v1098
        %v1115 = vadd.f32 %v1046, %v1098
        %v1116 = vadd.f32 %v1047, %v1098
        %v1117 = vadd.f32 %v1048, %v1098
        %v1118 = vadd.f32 %v1049, %v1098
        %v1119 = vadd.f32 %v1050, %v1098
        %v1120 = vadd.f32 %v1051, %v1098
        %v1121 = vadd.f32 %v1052, %v1098
        %v1122 = vadd.f32 %v1053, %v1098
        %v1123 = vadd.f32 %v1054, %v1098
        %v1124 = vadd.f32 %v1055, %v1098
        %v1125 = vadd.f32 %v1056, %v1098
        %v1126 = vadd.f32 %v1057, %v1098
        %v1127 = vadd.f32 %v1058, %v1098
        %v1128 = vadd.f32 %v1059, %v1098
        %v1129 = vadd.f32 %v1060, %v1098
        %v1130 = vadd.f32 %v1061, %v1098
        %v1131 = vadd.f32 %v1062, %v1098
        %v1132 = vadd.f32 %v1063, %v1098
        %v1133 = vadd.f32 %v1064, %v1098
        %v1134 = vadd.f32 %v1065, %v1098
        %v1135 = vadd.f32 %v1066, %v1098
        %v1136 = vadd.f32 %v1067, %v1098
        %v1137 = vadd.f32 %v1068, %v1098
        %v1138 = vadd.f32 %v1069, %v1098
        %v1139 = vadd.f32 %v1070, %v1098
        %v1140 = vadd.f32 %v1071, %v1098
        %v1141 = vadd.f32 %v1072, %v1098
        %v1142 = vadd.f32 %v1073, %v1098
        %v1143 = vadd.f32 %v1074, %v1098
        %v1144 = vadd.f32 %v1075, %v1098
        %v1145 = vadd.f32 %v1076, %v1098
        %v1146 = vadd.f32 %v1077, %v1098
        %v1147 = vadd.f32 %v1078, %v1098
        %v1148 = vadd.f32 %v1079, %v1098
        %v1149 = vadd.f32 %v1080, %v1098
        %v1150 = vadd.f32 %v1081, %v1098
        %v1151 = vadd.f32 %v1082, %v1098
        %v1152 = vadd.f32 %v1083, %v1098
        %v1153 = vadd.f32 %v1084, %v1098
        %v1154 = vadd.f32 %v1085, %v1098
        %v1155 = vadd.f32 %v1086, %v1098
        %v1156 = vadd.f32 %v1087, %v1098
        %v1157 = vadd.f32 %v1088, %v1098
        %v1158 = vadd.f32 %v1089, %v1098
        %v1159 = vadd.f32 %v1090, %v1098
        %v1160 = vadd.f32 %v1091, %v1098
        %v1161 = vadd.f32 %v1092, %v1098
        %v1162 = vadd.f32 %v1093, %v1098
        %v1163 = vmax.f32 %v1099, 0.0
        %v1164 = vmax.f32 %v1100, 0.0
        %v1165 = vmax.f32 %v1101, 0.0
        %v1166 = vmax.f32 %v1102, 0.0
        %v1167 = vmax.f32 %v1103, 0.0
        %v1168 = vmax.f32 %v1104, 0.0
        %v1169 = vmax.f32 %v1105, 0.0
        %v1170 = vmax.f32 %v1106, 0.0
        %v1171 = vmax.f32 %v1107, 0.0
        %v1172 = vmax.f32 %v1108, 0.0
        %v1173 = vmax.f32 %v1109, 0.0
        %v1174 = vmax.f32 %v1110, 0.0
        %v1175 = vmax.f32 %v1111, 0.0
        %v1176 = vmax.f32 %v1112, 0.0
        %v1177 = vmax.f32 %v1113, 0.0
        %v1178 = vmax.f32 %v1114, 0.0
        %v1179 = vmax.f32 %v1115, 0.0
        %v1180 = vmax.f32 %v1116, 0.0
        %v1181 = vmax.f32 %v1117, 0.0
        %v1182 = vmax.f32 %v1118, 0.0
        %v1183 = vmax.f32 %v1119, 0.0
        %v1184 = vmax.f32 %v1120, 0.0
        %v1185 = vmax.f32 %v1121, 0.0
        %v1186 = vmax.f32 %v1122, 0.0
        %v1187 = vmax.f32 %v1123, 0.0
        %v1188 = vmax.f32 %v1124, 0.0
        %v1189 = vmax.f32 %v1125, 0.0
        %v1190 = vmax.f32 %v1126, 0.0
        %v1191 = vmax.f32 %v1127, 0.0
        %v1192 = vmax.f32 %v1128, 0.0
        %v1193 = vmax.f32 %v1129, 0.0
        %v1194 = vmax.f32 %v1130, 0.0
        %v1195 = vmax.f32 %v1131, 0.0
        %v1196 = vmax.f32 %v1132, 0.0
        %v1197 = vmax.f32 %v1133, 0.0
        %v1198 = vmax.f32 %v1134, 0.0
        %v1199 = vmax.f32 %v1135, 0.0
        %v1200 = vmax.f32 %v1136, 0.0
        %v1201 = vmax.f32 %v1137, 0.0
        %v1202 = vmax.f32 %v1138, 0.0
        %v1203 = vmax.f32 %v1139, 0.0
        %v1204 = vmax.f32 %v1140, 0.0
        %v1205 = vmax.f32 %v1141, 0.0
        %v1206 = vmax.f32 %v1142, 0.0
        %v1207 = vmax.f32 %v1143, 0.0
        %v1208 = vmax.f32 %v1144, 0.0
        %v1209 = vmax.f32 %v1145, 0.0
        %v1210 = vmax.f32 %v1146, 0.0
        %v1211 = vmax.f32 %v1147, 0.0
        %v1212 = vmax.f32 %v1148, 0.0
        %v1213 = vmax.f32 %v1149, 0.0
        %v1214 = vmax.f32 %v1150, 0.0
        %v1215 = vmax.f32 %v1151, 0.0
        %v1216 = vmax.f32 %v1152, 0.0
        %v1217 = vmax.f32 %v1153, 0.0
        %v1218 = vmax.f32 %v1154, 0.0
        %v1219 = vmax.f32 %v1155, 0.0
        %v1220 = vmax.f32 %v1156, 0.0
        %v1221 = vmax.f32 %v1157, 0.0
        %v1222 = vmax.f32 %v1158, 0.0
        %v1223 = vmax.f32 %v1159, 0.0
        %v1224 = vmax.f32 %v1160, 0.0
        %v1225 = vmax.f32 %v1161, 0.0
        %v1226 = vmax.f32 %v1162, 0.0
        %v1227 = vpack.c.bf16 %v1164, %v1163
        %v1228 = vpack.c.bf16 %v1166, %v1165
        %v1229 = vpack.c.bf16 %v1168, %v1167
        %v1230 = vpack.c.bf16 %v1170, %v1169
        %v1231 = vpack.c.bf16 %v1172, %v1171
        %v1232 = vpack.c.bf16 %v1174, %v1173
        %v1233 = vpack.c.bf16 %v1176, %v1175
        %v1234 = vpack.c.bf16 %v1178, %v1177
        %v1235 = vpack.c.bf16 %v1180, %v1179
        %v1236 = vpack.c.bf16 %v1182, %v1181
        %v1237 = vpack.c.bf16 %v1184, %v1183
        %v1238 = vpack.c.bf16 %v1186, %v1185
        %v1239 = vpack.c.bf16 %v1188, %v1187
        %v1240 = vpack.c.bf16 %v1190, %v1189
        %v1241 = vpack.c.bf16 %v1192, %v1191
        %v1242 = vpack.c.bf16 %v1194, %v1193
        %v1243 = vpack.c.bf16 %v1196, %v1195
        %v1244 = vpack.c.bf16 %v1198, %v1197
        %v1245 = vpack.c.bf16 %v1200, %v1199
        %v1246 = vpack.c.bf16 %v1202, %v1201
        %v1247 = vpack.c.bf16 %v1204, %v1203
        %v1248 = vpack.c.bf16 %v1206, %v1205
        %v1249 = vpack.c.bf16 %v1208, %v1207
        %v1250 = vpack.c.bf16 %v1210, %v1209
        %v1251 = vpack.c.bf16 %v1212, %v1211
        %v1252 = vpack.c.bf16 %v1214, %v1213
        %v1253 = vpack.c.bf16 %v1216, %v1215
        %v1254 = vpack.c.bf16 %v1218, %v1217
        %v1255 = vpack.c.bf16 %v1220, %v1219
        %v1256 = vpack.c.bf16 %v1222, %v1221
        %v1257 = vpack.c.bf16 %v1224, %v1223
        %v1258 = vpack.c.bf16 %v1226, %v1225
        %v1291 = vunpack.c.l.b16 %v1227
        %v1292 = vunpack.c.h.b16 %v1227
        %v1293 = vunpack.c.l.b16 %v1228
        %v1294 = vunpack.c.h.b16 %v1228
        %v1295 = vunpack.c.l.b16 %v1229
        %v1296 = vunpack.c.h.b16 %v1229
        %v1297 = vunpack.c.l.b16 %v1230
        %v1298 = vunpack.c.h.b16 %v1230
        %v1299 = vunpack.c.l.b16 %v1231
        %v1300 = vunpack.c.h.b16 %v1231
        %v1301 = vunpack.c.l.b16 %v1232
        %v1302 = vunpack.c.h.b16 %v1232
        %v1303 = vunpack.c.l.b16 %v1233
        %v1304 = vunpack.c.h.b16 %v1233
        %v1305 = vunpack.c.l.b16 %v1234
        %v1306 = vunpack.c.h.b16 %v1234
        %v1307 = vunpack.c.l.b16 %v1235
        %v1308 = vunpack.c.h.b16 %v1235
        %v1309 = vunpack.c.l.b16 %v1236
        %v1310 = vunpack.c.h.b16 %v1236
        %v1311 = vunpack.c.l.b16 %v1237
        %v1312 = vunpack.c.h.b16 %v1237
        %v1313 = vunpack.c.l.b16 %v1238
        %v1314 = vunpack.c.h.b16 %v1238
        %v1315 = vunpack.c.l.b16 %v1239
        %v1316 = vunpack.c.h.b16 %v1239
        %v1317 = vunpack.c.l.b16 %v1240
        %v1318 = vunpack.c.h.b16 %v1240
        %v1319 = vunpack.c.l.b16 %v1241
        %v1320 = vunpack.c.h.b16 %v1241
        %v1321 = vunpack.c.l.b16 %v1242
        %v1322 = vunpack.c.h.b16 %v1242
        %v1323 = vunpack.c.l.b16 %v1243
        %v1324 = vunpack.c.h.b16 %v1243
        %v1325 = vunpack.c.l.b16 %v1244
        %v1326 = vunpack.c.h.b16 %v1244
        %v1327 = vunpack.c.l.b16 %v1245
        %v1328 = vunpack.c.h.b16 %v1245
        %v1329 = vunpack.c.l.b16 %v1246
        %v1330 = vunpack.c.h.b16 %v1246
        %v1331 = vunpack.c.l.b16 %v1247
        %v1332 = vunpack.c.h.b16 %v1247
        %v1333 = vunpack.c.l.b16 %v1248
        %v1334 = vunpack.c.h.b16 %v1248
        %v1335 = vunpack.c.l.b16 %v1249
        %v1336 = vunpack.c.h.b16 %v1249
        %v1337 = vunpack.c.l.b16 %v1250
        %v1338 = vunpack.c.h.b16 %v1250
        %v1339 = vunpack.c.l.b16 %v1251
        %v1340 = vunpack.c.h.b16 %v1251
        %v1341 = vunpack.c.l.b16 %v1252
        %v1342 = vunpack.c.h.b16 %v1252
        %v1343 = vunpack.c.l.b16 %v1253
        %v1344 = vunpack.c.h.b16 %v1253
        %v1345 = vunpack.c.l.b16 %v1254
        %v1346 = vunpack.c.h.b16 %v1254
        %v1347 = vunpack.c.l.b16 %v1255
        %v1348 = vunpack.c.h.b16 %v1255
        %v1349 = vunpack.c.l.b16 %v1256
        %v1350 = vunpack.c.h.b16 %v1256
        %v1351 = vunpack.c.l.b16 %v1257
        %v1352 = vunpack.c.h.b16 %v1257
        %v1353 = vunpack.c.l.b16 %v1258
        %v1354 = vunpack.c.h.b16 %v1258
        %v1355 = vpack.c.b16 %v1291, %v1291
        %v1356 = vpack.c.b16 %v1292, %v1292
        %v1357 = vpack.c.b16 %v1293, %v1293
        %v1358 = vpack.c.b16 %v1294, %v1294
        %v1359 = vpack.c.b16 %v1295, %v1295
        %v1360 = vpack.c.b16 %v1296, %v1296
        %v1361 = vpack.c.b16 %v1297, %v1297
        %v1362 = vpack.c.b16 %v1298, %v1298
        %v1363 = vpack.c.b16 %v1299, %v1299
        %v1364 = vpack.c.b16 %v1300, %v1300
        %v1365 = vpack.c.b16 %v1301, %v1301
        %v1366 = vpack.c.b16 %v1302, %v1302
        %v1367 = vpack.c.b16 %v1303, %v1303
        %v1368 = vpack.c.b16 %v1304, %v1304
        %v1369 = vpack.c.b16 %v1305, %v1305
        %v1370 = vpack.c.b16 %v1306, %v1306
        %v1371 = vpack.c.b16 %v1307, %v1307
        %v1372 = vpack.c.b16 %v1308, %v1308
        %v1373 = vpack.c.b16 %v1309, %v1309
        %v1374 = vpack.c.b16 %v1310, %v1310
        %v1375 = vpack.c.b16 %v1311, %v1311
        %v1376 = vpack.c.b16 %v1312, %v1312
        %v1377 = vpack.c.b16 %v1313, %v1313
        %v1378 = vpack.c.b16 %v1314, %v1314
        %v1379 = vpack.c.b16 %v1315, %v1315
        %v1380 = vpack.c.b16 %v1316, %v1316
        %v1381 = vpack.c.b16 %v1317, %v1317
        %v1382 = vpack.c.b16 %v1318, %v1318
        %v1383 = vpack.c.b16 %v1319, %v1319
        %v1384 = vpack.c.b16 %v1320, %v1320
        %v1385 = vpack.c.b16 %v1321, %v1321
        %v1386 = vpack.c.b16 %v1322, %v1322
        %v1387 = vpack.c.b16 %v1323, %v1323
        %v1388 = vpack.c.b16 %v1324, %v1324
        %v1389 = vpack.c.b16 %v1325, %v1325
        %v1390 = vpack.c.b16 %v1326, %v1326
        %v1391 = vpack.c.b16 %v1327, %v1327
        %v1392 = vpack.c.b16 %v1328, %v1328
        %v1393 = vpack.c.b16 %v1329, %v1329
        %v1394 = vpack.c.b16 %v1330, %v1330
        %v1395 = vpack.c.b16 %v1331, %v1331
        %v1396 = vpack.c.b16 %v1332, %v1332
        %v1397 = vpack.c.b16 %v1333, %v1333
        %v1398 = vpack.c.b16 %v1334, %v1334
        %v1399 = vpack.c.b16 %v1335, %v1335
        %v1400 = vpack.c.b16 %v1336, %v1336
        %v1401 = vpack.c.b16 %v1337, %v1337
        %v1402 = vpack.c.b16 %v1338, %v1338
        %v1403 = vpack.c.b16 %v1339, %v1339
        %v1404 = vpack.c.b16 %v1340, %v1340
        %v1405 = vpack.c.b16 %v1341, %v1341
        %v1406 = vpack.c.b16 %v1342, %v1342
        %v1407 = vpack.c.b16 %v1343, %v1343
        %v1408 = vpack.c.b16 %v1344, %v1344
        %v1409 = vpack.c.b16 %v1345, %v1345
        %v1410 = vpack.c.b16 %v1346, %v1346
        %v1411 = vpack.c.b16 %v1347, %v1347
        %v1412 = vpack.c.b16 %v1348, %v1348
        %v1413 = vpack.c.b16 %v1349, %v1349
        %v1414 = vpack.c.b16 %v1350, %v1350
        %v1415 = vpack.c.b16 %v1351, %v1351
        %v1416 = vpack.c.b16 %v1352, %v1352
        %v1417 = vpack.c.b16 %v1353, %v1353
        %v1418 = vpack.c.b16 %v1354, %v1354
        %1483 = vst [vmem:[%s206] sm:$0xf] %v1355
        %1484 = vst [vmem:[%s206 + $0x4] sm:$0xf] %v1356
        %1485 = vst [vmem:[%s206 + $0x8] sm:$0xf] %v1357
        %1486 = vst [vmem:[%s206 + $0xc] sm:$0xf] %v1358
        %1487 = vst [vmem:[%s206 + $0x10] sm:$0xf] %v1359
        %1488 = vst [vmem:[%s206 + $0x14] sm:$0xf] %v1360
        %1489 = vst [vmem:[%s206 + $0x18] sm:$0xf] %v1361
        %1490 = vst [vmem:[%s206 + $0x1c] sm:$0xf] %v1362
        %1491 = vst [vmem:[%s206 + $0x20] sm:$0xf] %v1363
        %1492 = vst [vmem:[%s206 + $0x24] sm:$0xf] %v1364
        %1493 = vst [vmem:[%s206 + $0x28] sm:$0xf] %v1365
        %1494 = vst [vmem:[%s206 + $0x2c] sm:$0xf] %v1366
        %1495 = vst [vmem:[%s206 + $0x30] sm:$0xf] %v1367
        %1496 = vst [vmem:[%s206 + $0x34] sm:$0xf] %v1368
        %1497 = vst [vmem:[%s206 + $0x38] sm:$0xf] %v1369
        %1498 = vst [vmem:[%s206 + $0x3c] sm:$0xf] %v1370
        %1499 = vst [vmem:[%s206 + $0x40] sm:$0xf] %v1371
        %1500 = vst [vmem:[%s206 + $0x44] sm:$0xf] %v1372
        %1501 = vst [vmem:[%s206 + $0x48] sm:$0xf] %v1373
        %1502 = vst [vmem:[%s206 + $0x4c] sm:$0xf] %v1374
        %1503 = vst [vmem:[%s206 + $0x50] sm:$0xf] %v1375
        %1504 = vst [vmem:[%s206 + $0x54] sm:$0xf] %v1376
        %1505 = vst [vmem:[%s206 + $0x58] sm:$0xf] %v1377
        %1506 = vst [vmem:[%s206 + $0x5c] sm:$0xf] %v1378
        %1507 = vst [vmem:[%s206 + $0x60] sm:$0xf] %v1379
        %1508 = vst [vmem:[%s206 + $0x64] sm:$0xf] %v1380
        %1509 = vst [vmem:[%s206 + $0x68] sm:$0xf] %v1381
        %1510 = vst [vmem:[%s206 + $0x6c] sm:$0xf] %v1382
        %1511 = vst [vmem:[%s206 + $0x70] sm:$0xf] %v1383
        %1512 = vst [vmem:[%s206 + $0x74] sm:$0xf] %v1384
        %1513 = vst [vmem:[%s206 + $0x78] sm:$0xf] %v1385
        %1514 = vst [vmem:[%s206 + $0x7c] sm:$0xf] %v1386
        %1515 = vst [vmem:[%s206 + $0x80] sm:$0xf] %v1387
        %1516 = vst [vmem:[%s206 + $0x84] sm:$0xf] %v1388
        %1517 = vst [vmem:[%s206 + $0x88] sm:$0xf] %v1389
        %1518 = vst [vmem:[%s206 + $0x8c] sm:$0xf] %v1390
        %1519 = vst [vmem:[%s206 + $0x90] sm:$0xf] %v1391
        %1520 = vst [vmem:[%s206 + $0x94] sm:$0xf] %v1392
        %1521 = vst [vmem:[%s206 + $0x98] sm:$0xf] %v1393
        %1522 = vst [vmem:[%s206 + $0x9c] sm:$0xf] %v1394
        %1523 = vst [vmem:[%s206 + $0xa0] sm:$0xf] %v1395
        %1524 = vst [vmem:[%s206 + $0xa4] sm:$0xf] %v1396
        %1525 = vst [vmem:[%s206 + $0xa8] sm:$0xf] %v1397
        %1526 = vst [vmem:[%s206 + $0xac] sm:$0xf] %v1398
        %1527 = vst [vmem:[%s206 + $0xb0] sm:$0xf] %v1399
        %1528 = vst [vmem:[%s206 + $0xb4] sm:$0xf] %v1400
        %1529 = vst [vmem:[%s206 + $0xb8] sm:$0xf] %v1401
        %1530 = vst [vmem:[%s206 + $0xbc] sm:$0xf] %v1402
        %1531 = vst [vmem:[%s206 + $0xc0] sm:$0xf] %v1403
        %1532 = vst [vmem:[%s206 + $0xc4] sm:$0xf] %v1404
        %1533 = vst [vmem:[%s206 + $0xc8] sm:$0xf] %v1405
        %1534 = vst [vmem:[%s206 + $0xcc] sm:$0xf] %v1406
        %1535 = vst [vmem:[%s206 + $0xd0] sm:$0xf] %v1407
        %1536 = vst [vmem:[%s206 + $0xd4] sm:$0xf] %v1408
        %1537 = vst [vmem:[%s206 + $0xd8] sm:$0xf] %v1409
        %1538 = vst [vmem:[%s206 + $0xdc] sm:$0xf] %v1410
        %1539 = vst [vmem:[%s206 + $0xe0] sm:$0xf] %v1411
        %1540 = vst [vmem:[%s206 + $0xe4] sm:$0xf] %v1412
        %1541 = vst [vmem:[%s206 + $0xe8] sm:$0xf] %v1413
        %1542 = vst [vmem:[%s206 + $0xec] sm:$0xf] %v1414
        %1543 = vst [vmem:[%s206 + $0xf0] sm:$0xf] %v1415
        %1544 = vst [vmem:[%s206 + $0xf4] sm:$0xf] %v1416
        %1545 = vst [vmem:[%s206 + $0xf8] sm:$0xf] %v1417
        %1546 = vst [vmem:[%s206 + $0xfc] sm:$0xf] %v1418
        %s1547 = sand.u32 %s117, 1
        %s1548 = scalar_lea.sflag [#allocation3], %s1547
        %s1549 = sand.u32 %s117, 1
        %s1550 = smul.addr %s1549, 256
        %s1551 = scalar_lea.vmem [#allocation2], %s1550
        // Predicated region
        $region33: #{_conv_bn_impl.1} parent=31 // pred_check
          %p1552 = pneg %p127
        $region34: #{_conv_bn_impl.1} parent=31 // pred_check_branch
          %1554 = sbr.rel (%p1552) target = $region36
        $region35: #{_conv_bn_impl.1} parent=31 // pred_region
          %s1555 = smul.u32 64, %s21
          %s1557 = ssub.s32 4096, 4096
          %1558 = vsyncadd %s1548, %s1557
          %s1559 = sadd.s32 %s22, %s1555
          %s1560 = smul.addr %s1559, 64
          %s1561 = scalar_lea.hbm %s3, %s1560
          %s1562 = sshll.u32 %s1551, 4
          %s1563 = int_to_ptr.vmem [resolvable:$true] %s1562
          %1568 = dma.vmem_to_hbm [thread:$0]  %s1563, 4096, %s1561, %s1548, 64, 64, 4
        $region36: #{_conv_bn_impl.1} parent=31 // pred_fallthru
          _
      $region32: #{_conv_bn_impl.1} parent=5 // pred_fallthru
        _
      %p1569 = scmp.le.s32.totalorder 2, %s12
      // Predicated region
      $region37: #{_conv_bn_impl.1} parent=5 // pred_check
        %p1570 = pneg %p1569
      $region38: #{_conv_bn_impl.1} parent=5 // pred_check_branch
        %1572 = sbr.rel (%p1570) target = $region40
      $region39: #{_conv_bn_impl.1} parent=5 // pred_region
        %s1573 = ssub.s32 %s12, 2
        // Predicated region
        $region41: #{_conv_bn_impl.1} parent=39 // pred_check
          %p1574 = pneg %p133
        $region42: #{_conv_bn_impl.1} parent=39 // pred_check_branch
          %1576 = sbr.rel (%p1574) target = $region44
        $region43: #{_conv_bn_impl.1} parent=39 // pred_region
          %s1577 = sand.u32 %s118, 1
          %s1578 = scalar_lea.sflag [#allocation3], %s1577
          %s1579 = sand.u32 %s118, 1
          %s1580 = smul.addr %s1579, 256
          %s1581 = scalar_lea.vmem [#allocation2], %s1580
          %1582 = dma.done %s1578, 4096
        $region44: #{_conv_bn_impl.1} parent=39 // pred_fallthru
          _
      $region40: #{_conv_bn_impl.1} parent=5 // pred_fallthru
        _
    $region6: #{_conv_bn_impl.1} parent=1 // loop_footer
      %s16 = sadd.s32 1, %s12
    $region7: #{_conv_bn_impl.1} parent=1 // loop_footer_branch
      %11 = sbr.rel target = $region3
    $region8: #{_conv_bn_impl.1} parent=1 // loop_exit
      _
    %1583 = vsyncpa [#allocation3], 1
    %s1584 = scalar_lea.sflag [#allocation3], 1
    %1585 = vsyncpa %s1584, 1

</llo_original>
